<compile_context>
chip_gen: v7x
topology: tpu7x:2x2x1
jax: 0.10.0
libtpu: 0.0.40
codegen_flags: <defaults>
</compile_context>

<pallas_src>
import functools

import jax
import jax.numpy as jnp
from jax import lax
from jax.experimental import pallas as pl
from jax.experimental.pallas import tpu as pltpu

SQ_CH = 12  # squeeze_layer output channels (fixed by the module)


def _round_up(v, m):
    return ((v + m - 1) // m) * m


def _pick_lane_tile(m, cap=2048, align=128):
    """Largest lane tile <= cap that divides M and is 128-aligned, else M."""
    if m <= cap or m % align != 0:
        return m
    t = (min(cap, m) // align) * align
    while t >= align:
        if m % t == 0:
            return t
        t -= align
    return m


def _pick_row_tile(ho, wo):
    """Output rows per kernel-2 step (divides Ho, lane-dense TR*Wo)."""
    for tr in range(min(ho, 8), 0, -1):
        if ho % tr == 0 and (tr * wo) % 128 == 0:
            return tr
    return ho  # single tile per image (full-dim block, still valid)


# ---------------------------------------------------------------------------
# Kernel 1: fused 1x1 conv + sigmoid + channel concat (channels-first).
# ---------------------------------------------------------------------------
def _squeeze_concat_kernel(x_ref, l_ref, w_ref, b_ref, o_ref, *, n_class, c_pad):
    # x:(1,Cin,tm) f32  l:(1,ncl,tm) f32  w:(12,Cin) f32  b:(12,1) f32
    # o:(1,Ct,tm) bf16  rows [0:12)=sigmoid(conv1x1), [12:12+ncl)=left, rest 0.
    z = jnp.dot(w_ref[...], x_ref[0], preferred_element_type=jnp.float32)
    z = z + b_ref[...]
    sig = pl.reciprocal(1.0 + jnp.exp(-z), approx=True)      # EUP exp + EUP rcp
    pieces = [sig.astype(o_ref.dtype), l_ref[0].astype(o_ref.dtype)]
    if c_pad > 0:
        pieces.append(jnp.zeros((c_pad, sig.shape[1]), o_ref.dtype))
    o_ref[0] = jnp.concatenate(pieces, axis=0)


def _squeeze_concat(down, left, w1, b1, ct):
    n, cin, m = down.shape
    ncl = left.shape[1]
    tm = _pick_lane_tile(m)
    kernel = functools.partial(_squeeze_concat_kernel, n_class=ncl,
                               c_pad=ct - SQ_CH - ncl)
    return pl.pallas_call(
        kernel,
        out_shape=jax.ShapeDtypeStruct((n, ct, m), jnp.bfloat16),
        grid=(n, m // tm),
        in_specs=[
            pl.BlockSpec((1, cin, tm), lambda i, j: (i, 0, j)),
            pl.BlockSpec((1, ncl, tm), lambda i, j: (i, 0, j)),
            pl.BlockSpec((SQ_CH, cin), lambda i, j: (0, 0)),
            pl.BlockSpec((SQ_CH, 1), lambda i, j: (0, 0)),
        ],
        out_specs=pl.BlockSpec((1, ct, tm), lambda i, j: (i, 0, j)),
        compiler_params=pltpu.CompilerParams(
            dimension_semantics=("parallel", "parallel")),
        cost_estimate=pl.CostEstimate(
            flops=2 * n * m * cin * SQ_CH,
            transcendentals=2 * n * m * SQ_CH,
            bytes_accessed=n * m * (cin + ncl) * 4 + n * m * ct * 2),
    )(down, left, w1, b1)


# ---------------------------------------------------------------------------
# Wrapper relayout: pad + row/col parity split + dc & halo duplication.
# ---------------------------------------------------------------------------
def _parity_halo_relayout(xcat, ho, wo, tr):
    """(N, Ct, H, W) -> (N, R, K=8*Ct, (TR+1)*Wo), K-order = (pr, pc, dc, c).

    After this, conv tap (ki, kj) with ki = 2*dr + pr, kj = 2*dc + pc is a
    pure lane-offset slice [dr*Wo : dr*Wo + TR*Wo] of one flat operand.
    """
    # TODO(synk): fold this single relayout pass into kernel 1's out_spec/grid
    # to remove one HBM round trip of the activation.
    n, ct, _, _ = xcat.shape
    r_tiles = ho // tr
    xp = jnp.pad(xcat, ((0, 0), (0, 0), (1, 1), (1, 1)))
    xp = xp.reshape(n, ct, ho + 1, 2, wo + 1, 2)            # (n,c,i,pr,j,pc)
    xp = xp.transpose(0, 3, 5, 1, 2, 4)                     # (n,pr,pc,c,i,j)
    xp = jnp.stack([xp[..., 0:wo], xp[..., 1:wo + 1]], axis=3)
    # (n, pr, pc, dc, c, Ho+1, Wo)
    row_idx = jnp.arange(r_tiles)[:, None] * tr + jnp.arange(tr + 1)[None, :]
    xp = xp[:, :, :, :, :, row_idx, :]                      # (...,c,R,TR+1,Wo)
    xp = jnp.moveaxis(xp, 5, 1)                             # (n,R,pr,pc,dc,c,TR+1,Wo)
    return xp.reshape(n, r_tiles, 8 * ct, (tr + 1) * wo)


def _prep_conv_weight(w2_sn, ct):
    """(out_f, 12+ncl, 4, 4) -> (2_dr, out_f, K=8*Ct), K-order (pr,pc,dc,c)."""
    out_f, c_real = w2_sn.shape[0], w2_sn.shape[1]
    wt = jnp.transpose(w2_sn, (2, 3, 1, 0))                 # (ki, kj, c, o)
    wt = wt.reshape(2, 2, 2, 2, c_real, out_f)              # (dr,pr,dc,pc,c,o)
    wt = wt.transpose(0, 1, 3, 2, 4, 5)                     # (dr,pr,pc,dc,c,o)
    wt = jnp.pad(wt, ((0, 0),) * 4 + ((0, ct - c_real), (0, 0)))
    wt = wt.reshape(2, 8 * ct, out_f).transpose(0, 2, 1)    # (dr, out_f, K)
    return wt.astype(jnp.bfloat16)


# ---------------------------------------------------------------------------
# Kernel 2: 4x4/s2 conv as two deep-K MXU dots + bias + tanh (lane-dense out).
# ---------------------------------------------------------------------------
def _downsample_kernel(xp_ref, w_ref, b_ref, o_ref, *, wo, m):
    # xp:(1,1,K,(TR+1)*Wo) bf16  w:(2,out_f,K) bf16  b:(out_f,1) f32
    # o:(1,out_f,TR*Wo) f32
    x0 = xp_ref[0, 0, :, 0:m]              # row taps ki in {0,1}   (dr = 0)
    x1 = xp_ref[0, 0, :, wo:wo + m]        # row taps ki in {2,3}   (dr = 1)
    acc = jnp.dot(w_ref[0], x0, preferred_element_type=jnp.float32)
    acc = acc + jnp.dot(w_ref[1], x1, preferred_element_type=jnp.float32)
    o_ref[0] = jnp.tanh(acc + b_ref[...]).astype(o_ref.dtype)


def _downsample_conv_tanh(xp, w_dr, b2, *, n, ho, wo, tr, out_f):
    k = w_dr.shape[2]
    lp = (tr + 1) * wo
    m = tr * wo
    r_tiles = ho // tr
    kernel = functools.partial(_downsample_kernel, wo=wo, m=m)
    return pl.pallas_call(
        kernel,
        out_shape=jax.ShapeDtypeStruct((n, out_f, ho * wo), jnp.float32),
        grid=(n, r_tiles),
        in_specs=[
            pl.BlockSpec((1, 1, k, lp), lambda i, r: (i, r, 0, 0)),
            pl.BlockSpec((2, out_f, k), lambda i, r: (0, 0, 0)),
            pl.BlockSpec((out_f, 1), lambda i, r: (0, 0)),
        ],
        out_specs=pl.BlockSpec((1, out_f, m), lambda i, r: (i, 0, r)),
        compiler_params=pltpu.CompilerParams(
            dimension_semantics=("parallel", "parallel")),
        cost_estimate=pl.CostEstimate(
            flops=2 * n * ho * wo * 2 * k * out_f,
            transcendentals=n * ho * wo * out_f,
            bytes_accessed=(xp.size + w_dr.size) * 2 + b2.size * 4
                           + n * ho * wo * out_f * 4),
    )(xp, w_dr, b2)


# ---------------------------------------------------------------------------
# Spectral norm: one power-iteration step with persistent u (PyTorch-style).
# ---------------------------------------------------------------------------
def _spectral_norm_weight(w2, u):
    out_f = w2.shape[0]
    w_mat = w2.reshape(out_f, -1).astype(jnp.float32)
    u = u.astype(jnp.float32)
    v = w_mat.T @ u
    v = v / (jnp.linalg.norm(v) + 1e-12)
    u_new = w_mat @ v
    u_new = u_new / (jnp.linalg.norm(u_new) + 1e-12)
    sigma = u_new @ (w_mat @ v)
    return w2.astype(jnp.float32) / sigma, u_new


# ---------------------------------------------------------------------------
# Forward pass (public API: NCHW in / NCHW out, like the PyTorch module).
# ---------------------------------------------------------------------------
def conv_downsample_block(down_input, left_input, params):
    n, cin, h, w = down_input.shape
    ncl = left_input.shape[1]
    out_f = params["w2"].shape[0]
    assert h % 2 == 0 and w % 2 == 0, "even H/W expected for k=4,s=2,p=1"
    # TODO(synk): odd H/W is valid for Conv2d(k=4,s=2,p=1) but is not handled
    # by the parity re-layout below.
    ho, wo = h // 2, w // 2
    ct = _round_up(SQ_CH + ncl, 8)          # channel pad -> K = 8*Ct (128 here)

    # spectral norm (tiny matvec in plain JAX, off the kernel path)
    w2_sn, _u_new = _spectral_norm_weight(params["w2"], params["u"])
    # TODO(synk): training parity needs the updated `u` threaded back into the
    # module state; this functional forward recomputes it each call.

    # --- kernel 1: 1x1 conv + sigmoid + concat, channels-first --------------
    down2 = down_input.reshape(n, cin, h * w).astype(jnp.float32)
    left2 = left_input.reshape(n, ncl, h * w).astype(jnp.float32)
    w1 = params["w1"].reshape(SQ_CH, cin).astype(jnp.float32)
    b1 = params["b1"].reshape(SQ_CH, 1).astype(jnp.float32)
    xcat = _squeeze_concat(down2, left2, w1, b1, ct)        # (N, Ct, H*W) bf16
    xcat = xcat.reshape(n, ct, h, w)

    # --- single XLA relayout: pad + parity split + dc/halo duplication ------
    tr = _pick_row_tile(ho, wo)
    xp = _parity_halo_relayout(xcat, ho, wo, tr)            # (N,R,8*Ct,(TR+1)*Wo)

    # --- kernel 2: two K=8*Ct dots per row tile + bias + tanh ---------------
    w_dr = _prep_conv_weight(w2_sn, ct)                     # (2, out_f, 8*Ct)
    b2 = params["b2"].reshape(out_f, 1).astype(jnp.float32)
    out = _downsample_conv_tanh(xp, w_dr, b2, n=n, ho=ho, wo=wo, tr=tr,
                                out_f=out_f)                # (N, out_f, Ho*Wo)
    return out.reshape(n, out_f, ho, wo)                    # NCHW, no transpose


# ---------------------------------------------------------------------------
# Pure-JAX reference (mirrors the kernel's bf16 quantization points).
# ---------------------------------------------------------------------------
def _reference_forward(down_input, left_input, params):
    n, cin, h, w = down_input.shape
    out_f = params["w2"].shape[0]
    w2_sn, _ = _spectral_norm_weight(params["w2"], params["u"])

    w1 = params["w1"].reshape(SQ_CH, cin).astype(jnp.float32)
    z = jnp.einsum("oc,nchw->nohw", w1, down_input.astype(jnp.float32),
                   precision=lax.Precision.HIGHEST)
    z = z + params["b1"].reshape(1, SQ_CH, 1, 1)
    sq = jax.nn.sigmoid(z).astype(jnp.bfloat16).astype(jnp.float32)
    lf = left_input.astype(jnp.bfloat16).astype(jnp.float32)

    x = jnp.concatenate([sq, lf], axis=1)
    wconv = w2_sn.astype(jnp.bfloat16).astype(jnp.float32)
    y = lax.conv_general_dilated(
        x, wconv, window_strides=(2, 2), padding=((1, 1), (1, 1)),
        dimension_numbers=("NCHW", "OIHW", "NCHW"),
        precision=lax.Precision.HIGHEST,
        preferred_element_type=jnp.float32)
    y = jnp.tanh(y + params["b2"].reshape(1, out_f, 1, 1))
    return y


# ---------------------------------------------------------------------------
# Demo / smoke test.
# ---------------------------------------------------------------------------
if __name__ == "__main__":
    in_filters, out_filters, n_class = 4, 8, 3
    nb, H, W = 2, 32, 32

    key = jax.random.PRNGKey(0)
    k1, k2, k3, k4, k5, k6, k7 = jax.random.split(key, 7)

    u0 = jax.random.normal(k7, (out_filters,), jnp.float32)
    u0 = u0 / jnp.linalg.norm(u0)
    params = {
        "w1": 0.1 * jax.random.normal(k1, (SQ_CH, in_filters, 1, 1), jnp.float32),
        "b1": 0.1 * jax.random.normal(k2, (SQ_CH,), jnp.float32),
        "w2": 0.1 * jax.random.normal(
            k3, (out_filters, SQ_CH + n_class, 4, 4), jnp.float32),
        "b2": 0.1 * jax.random.normal(k4, (out_filters,), jnp.float32),
        "u": u0,                      # persistent spectral-norm vector
    }

    down_input = jax.random.normal(k5, (nb, in_filters, H, W), jnp.float32)
    left_input = jax.random.normal(k6, (nb, n_class, H, W), jnp.float32)

    fwd = jax.jit(conv_downsample_block)
    out = jax.block_until_ready(fwd(down_input, left_input, params))

    assert out.shape == (nb, out_filters, H // 2, W // 2), out.shape
    assert bool(jnp.all(jnp.isfinite(out)))

    ref = _reference_forward(down_input, left_input, params)
    max_err = float(jnp.max(jnp.abs(out - ref)))
    assert max_err < 2e-2, f"mismatch vs reference: {max_err}"
    print("KERNEL_OK")
</pallas_src>

<mosaic_0001>
module attributes {stable_mosaic.version = 11 : i64} {
  func.func @_squeeze_concat_kernel(%arg0: i32, %arg1: i32, %arg2: memref<1x4x1024xf32, #tpu.memory_space<vmem>>, %arg3: memref<1x3x1024xf32, #tpu.memory_space<vmem>>, %arg4: memref<12x4xf32, #tpu.memory_space<vmem>>, %arg5: memref<12x1xf32, #tpu.memory_space<vmem>>, %arg6: memref<1x16x1024xbf16, #tpu.memory_space<vmem>>) attributes {dimension_semantics = [#tpu.dimension_semantics<parallel>, #tpu.dimension_semantics<parallel>], iteration_bounds = array<i64: 2, 1>, scalar_prefetch = 0 : i64, scratch_operands = 0 : i64, tpu.core_type = #tpu.core_type<tc>, window_params = [{transform_indices = @transform_0, window_bounds = array<i64: 1, 4, 1024>}, {transform_indices = @transform_1, window_bounds = array<i64: 1, 3, 1024>}, {pipeline_mode = #tpu.pipeline_mode<synchronous>, transform_indices = @transform_2, window_bounds = array<i64: 12, 4>}, {pipeline_mode = #tpu.pipeline_mode<synchronous>, transform_indices = @transform_3, window_bounds = array<i64: 12, 1>}, {transform_indices = @transform_4, window_bounds = array<i64: 1, 16, 1024>}]} {
    %c0 = arith.constant 0 : index
    %c0_0 = arith.constant 0 : index
    %0 = vector.load %arg4[%c0, %c0_0] : memref<12x4xf32, #tpu.memory_space<vmem>>, vector<12x4xf32>
    %c0_1 = arith.constant 0 : index
    %c0_2 = arith.constant 0 : index
    %c0_3 = arith.constant 0 : index
    %1 = vector.load %arg2[%c0_1, %c0_2, %c0_3] : memref<1x4x1024xf32, #tpu.memory_space<vmem>>, vector<1x4x1024xf32>
    %2 = vector.shape_cast %1 : vector<1x4x1024xf32> to vector<4x1024xf32>
    %cst = arith.constant dense<0.000000e+00> : vector<12x1024xf32>
    %3 = tpu.matmul %0, %2, %cst {dimension_numbers = #tpu.dot_dimension_numbers<[1], [0], [0], [1], [0, 0, 1, 1], [], []>} : vector<12x4xf32>, vector<4x1024xf32>, vector<12x1024xf32> -> vector<12x1024xf32>
    %c0_4 = arith.constant 0 : index
    %c0_5 = arith.constant 0 : index
    %4 = vector.load %arg5[%c0_4, %c0_5] : memref<12x1xf32, #tpu.memory_space<vmem>>, vector<12x1xf32>
    %5 = vector.broadcast %4 : vector<12x1xf32> to vector<12x1024xf32>
    %6 = arith.addf %3, %5 : vector<12x1024xf32>
    %cst_6 = arith.constant 0.000000e+00 : f32
    %7 = vector.broadcast %cst_6 : f32 to vector<12x1024xf32>
    %8 = arith.subf %7, %6 : vector<12x1024xf32>
    %9 = math.exp %8 : vector<12x1024xf32>
    %cst_7 = arith.constant 1.000000e+00 : f32
    %10 = vector.broadcast %cst_7 : f32 to vector<12x1024xf32>
    %11 = arith.addf %10, %9 : vector<12x1024xf32>
    %12 = tpu.reciprocal %11 {approx = true} : vector<12x1024xf32> -> vector<12x1024xf32>
    %13 = arith.truncf %12 : vector<12x1024xf32> to vector<12x1024xbf16>
    %c0_8 = arith.constant 0 : index
    %c0_9 = arith.constant 0 : index
    %c0_10 = arith.constant 0 : index
    %14 = vector.load %arg3[%c0_8, %c0_9, %c0_10] : memref<1x3x1024xf32, #tpu.memory_space<vmem>>, vector<1x3x1024xf32>
    %15 = vector.shape_cast %14 : vector<1x3x1024xf32> to vector<3x1024xf32>
    %16 = arith.truncf %15 : vector<3x1024xf32> to vector<3x1024xbf16>
    %cst_11 = arith.constant 0.000000e+00 : bf16
    %17 = vector.broadcast %cst_11 : bf16 to vector<1x1024xbf16>
    %18 = tpu.concatenate %13, %16, %17 in 0 : vector<12x1024xbf16>, vector<3x1024xbf16>, vector<1x1024xbf16> -> vector<16x1024xbf16>
    %c0_12 = arith.constant 0 : index
    %c0_13 = arith.constant 0 : index
    %c0_14 = arith.constant 0 : index
    %19 = vector.load %arg6[%c0_12, %c0_13, %c0_14] : memref<1x16x1024xbf16, #tpu.memory_space<vmem>>, vector<1x16x1024xbf16>
    %20 = vector.shape_cast %19 : vector<1x16x1024xbf16> to vector<16x1024xbf16>
    %21 = vector.shape_cast %18 : vector<16x1024xbf16> to vector<1x16x1024xbf16>
    tpu.vector_store %arg6[%c0_12, %c0_13, %c0_14], %21 {strides = array<i32>} : memref<1x16x1024xbf16, #tpu.memory_space<vmem>>, vector<1x16x1024xbf16>,
    return
  }
  func.func @transform_0(%arg0: i32, %arg1: i32) -> (i32, i32, i32) {
    %c0_i32 = arith.constant 0 : i32
    %c0_i32_0 = arith.constant 0 : i32
    return %arg0, %c0_i32, %arg1 : i32, i32, i32
  }
  func.func @transform_1(%arg0: i32, %arg1: i32) -> (i32, i32, i32) {
    %c0_i32 = arith.constant 0 : i32
    %c0_i32_0 = arith.constant 0 : i32
    return %arg0, %c0_i32, %arg1 : i32, i32, i32
  }
  func.func @transform_2(%arg0: i32, %arg1: i32) -> (i32, i32) {
    %c0_i32 = arith.constant 0 : i32
    %c0_i32_0 = arith.constant 0 : i32
    %c0_i32_1 = arith.constant 0 : i32
    return %c0_i32, %c0_i32_0 : i32, i32
  }
  func.func @transform_3(%arg0: i32, %arg1: i32) -> (i32, i32) {
    %c0_i32 = arith.constant 0 : i32
    %c0_i32_0 = arith.constant 0 : i32
    %c0_i32_1 = arith.constant 0 : i32
    return %c0_i32, %c0_i32_0 : i32, i32
  }
  func.func @transform_4(%arg0: i32, %arg1: i32) -> (i32, i32, i32) {
    %c0_i32 = arith.constant 0 : i32
    %c0_i32_0 = arith.constant 0 : i32
    return %arg0, %c0_i32, %arg1 : i32, i32, i32
  }
}

module attributes {stable_mosaic.version = 11 : i64} {
  func.func @_downsample_kernel(%arg0: i32, %arg1: i32, %arg2: memref<1x1x128x144xbf16, #tpu.memory_space<vmem>>, %arg3: memref<2x8x128xbf16, #tpu.memory_space<vmem>>, %arg4: memref<8x1xf32, #tpu.memory_space<vmem>>, %arg5: memref<1x8x128xf32, #tpu.memory_space<vmem>>) attributes {dimension_semantics = [#tpu.dimension_semantics<parallel>, #tpu.dimension_semantics<parallel>], iteration_bounds = array<i64: 2, 2>, scalar_prefetch = 0 : i64, scratch_operands = 0 : i64, tpu.core_type = #tpu.core_type<tc>, window_params = [{transform_indices = @transform_0, window_bounds = array<i64: 1, 1, 128, 144>}, {pipeline_mode = #tpu.pipeline_mode<synchronous>, transform_indices = @transform_1, window_bounds = array<i64: 2, 8, 128>}, {pipeline_mode = #tpu.pipeline_mode<synchronous>, transform_indices = @transform_2, window_bounds = array<i64: 8, 1>}, {transform_indices = @transform_3, window_bounds = array<i64: 1, 8, 128>}]} {
    %c0 = arith.constant 0 : index
    %c0_0 = arith.constant 0 : index
    %c0_1 = arith.constant 0 : index
    %c0_2 = arith.constant 0 : index
    %0 = vector.load %arg2[%c0, %c0_0, %c0_1, %c0_2] : memref<1x1x128x144xbf16, #tpu.memory_space<vmem>>, vector<1x1x128x128xbf16>
    %1 = vector.shape_cast %0 : vector<1x1x128x128xbf16> to vector<128x128xbf16>
    %c0_3 = arith.constant 0 : index
    %c0_4 = arith.constant 0 : index
    %c0_5 = arith.constant 0 : index
    %c16 = arith.constant 16 : index
    %2 = vector.load %arg2[%c0_3, %c0_4, %c0_5, %c16] : memref<1x1x128x144xbf16, #tpu.memory_space<vmem>>, vector<1x1x128x128xbf16>
    %3 = vector.shape_cast %2 : vector<1x1x128x128xbf16> to vector<128x128xbf16>
    %c0_6 = arith.constant 0 : index
    %c0_7 = arith.constant 0 : index
    %c0_8 = arith.constant 0 : index
    %4 = vector.load %arg3[%c0_6, %c0_7, %c0_8] : memref<2x8x128xbf16, #tpu.memory_space<vmem>>, vector<1x8x128xbf16>
    %5 = vector.shape_cast %4 : vector<1x8x128xbf16> to vector<8x128xbf16>
    %cst = arith.constant dense<0.000000e+00> : vector<8x128xf32>
    %6 = tpu.matmul %5, %1, %cst {dimension_numbers = #tpu.dot_dimension_numbers<[1], [0], [0], [1], [0, 0, 1, 1], [], []>} : vector<8x128xbf16>, vector<128x128xbf16>, vector<8x128xf32> -> vector<8x128xf32>
    %c1 = arith.constant 1 : index
    %c0_9 = arith.constant 0 : index
    %c0_10 = arith.constant 0 : index
    %7 = vector.load %arg3[%c1, %c0_9, %c0_10] : memref<2x8x128xbf16, #tpu.memory_space<vmem>>, vector<1x8x128xbf16>
    %8 = vector.shape_cast %7 : vector<1x8x128xbf16> to vector<8x128xbf16>
    %cst_11 = arith.constant dense<0.000000e+00> : vector<8x128xf32>
    %9 = tpu.matmul %8, %3, %cst_11 {dimension_numbers = #tpu.dot_dimension_numbers<[1], [0], [0], [1], [0, 0, 1, 1], [], []>} : vector<8x128xbf16>, vector<128x128xbf16>, vector<8x128xf32> -> vector<8x128xf32>
    %10 = arith.addf %6, %9 : vector<8x128xf32>
    %c0_12 = arith.constant 0 : index
    %c0_13 = arith.constant 0 : index
    %11 = vector.load %arg4[%c0_12, %c0_13] : memref<8x1xf32, #tpu.memory_space<vmem>>, vector<8x1xf32>
    %12 = vector.broadcast %11 : vector<8x1xf32> to vector<8x128xf32>
    %13 = arith.addf %10, %12 : vector<8x128xf32>
    %14 = math.tanh %13 : vector<8x128xf32>
    %c0_14 = arith.constant 0 : index
    %c0_15 = arith.constant 0 : index
    %c0_16 = arith.constant 0 : index
    %15 = vector.load %arg5[%c0_14, %c0_15, %c0_16] : memref<1x8x128xf32, #tpu.memory_space<vmem>>, vector<1x8x128xf32>
    %16 = vector.shape_cast %15 : vector<1x8x128xf32> to vector<8x128xf32>
    %17 = vector.shape_cast %14 : vector<8x128xf32> to vector<1x8x128xf32>
    tpu.vector_store %arg5[%c0_14, %c0_15, %c0_16], %17 {strides = array<i32>} : memref<1x8x128xf32, #tpu.memory_space<vmem>>, vector<1x8x128xf32>,
    return
  }
  func.func @transform_0(%arg0: i32, %arg1: i32) -> (i32, i32, i32, i32) {
    %c0_i32 = arith.constant 0 : i32
    %c0_i32_0 = arith.constant 0 : i32
    %c0_i32_1 = arith.constant 0 : i32
    return %arg0, %arg1, %c0_i32, %c0_i32_0 : i32, i32, i32, i32
  }
  func.func @transform_1(%arg0: i32, %arg1: i32) -> (i32, i32, i32) {
    %c0_i32 = arith.constant 0 : i32
    %c0_i32_0 = arith.constant 0 : i32
    %c0_i32_1 = arith.constant 0 : i32
    %c0_i32_2 = arith.constant 0 : i32
    return %c0_i32, %c0_i32_0, %c0_i32_1 : i32, i32, i32
  }
  func.func @transform_2(%arg0: i32, %arg1: i32) -> (i32, i32) {
    %c0_i32 = arith.constant 0 : i32
    %c0_i32_0 = arith.constant 0 : i32
    %c0_i32_1 = arith.constant 0 : i32
    return %c0_i32, %c0_i32_0 : i32, i32
  }
  func.func @transform_3(%arg0: i32, %arg1: i32) -> (i32, i32, i32) {
    %c0_i32 = arith.constant 0 : i32
    %c0_i32_0 = arith.constant 0 : i32
    return %arg0, %c0_i32, %arg1 : i32, i32, i32
  }
}

</mosaic_0001>

<llo_original>
// kernel: conv_downsample_block.2
$region0: #{conv_downsample_block.2}
  #allocation0 [shape = 'u32[]', space=smem, size = 0x4, offset = 0x4, fixed_abs, tag = 'smem constant byte address 0x4 - core index']
  #allocation1 [shape = 'u32[144,128]{1,0:T(1,128)}', space=vmem, size = 0x12000, scoped, tag = 'internal scratch']
  %s0 = inlined_call_operand.vmem [shape: f32[2,4,1024], index: 0, kind: input, shape index: {}]
  %s1 = inlined_call_operand.vmem [shape: f32[2,3,1024], index: 1, kind: input, shape index: {}]
  %s2 = inlined_call_operand.vmem [shape: f32[12,4], index: 2, kind: input, shape index: {}]
  %s3 = inlined_call_operand.vmem [shape: f32[12,1], index: 3, kind: input, shape index: {}]
  %s4 = inlined_call_operand.vmem [shape: bf16[2,16,1024], index: 4, kind: output, shape index: {}]
  %s5 = sld [smem:[#allocation0]]
  $region49: #{conv_downsample_block.2} parent=0
    _
  %s7 = ssub.s32 1, %s5
  %s8 = scalar_select 0, %s7, %s5
  loop: start=0, step=1, limit=4
  $region2: #{conv_downsample_block.2} parent=0 // loop_pre_header
    _
  $region3: #{conv_downsample_block.2} parent=0 // loop_header
    %s10 = sphi 0, %s14
    %p11 = scmp.ge.s32.totalorder %s10, 4
    %s17 = sphi 0, %s29
    %s18 = sphi 0, %s25
    %s19 = sphi 0, %s17
    %s20 = sphi 0, %s18
    %s21 = sphi 0, %s19
    %s22 = sphi 0, %s20
    %s34 = sphi 0, %s36
    %s37 = sphi 0, %s34
    %s38 = sphi 0, %s37
    %s54 = sphi 0, %s38
    %s62 = sphi 0, %s64
    %s65 = sphi 0, %s62
    %s66 = sphi 0, %s65
    %s82 = sphi 0, %s66
    %s86 = sphi 0, %s86
    %s88 = sphi 0, %s86
    %s89 = sphi 0, %s88
    %s103 = sphi 0, %s89
    %s107 = sphi 0, %s107
    %s109 = sphi 0, %s107
    %s110 = sphi 0, %s109
    %s124 = sphi 0, %s110
    %s132 = sphi 0, %s134
    %s135 = sphi 0, %s132
    %s136 = sphi 0, %s135
    %s152 = sphi 0, %s136
  $region4: #{conv_downsample_block.2} parent=0 // loop_header_branch
    %13 = sbr.rel (%p11) target = $region8
  $region5: #{conv_downsample_block.2} parent=0 // loop_body
    %s15 = ssub.s32 %s10, 1
    %s16 = ssub.s32 %s10, 2
    %s23 = sadd.s32 1, %s18
    %p24 = scmp.ge.s32.totalorder %s23, 1
    %s25 = scalar_select %p24, 0, %s23
    %s26 = sadd.s32 1, %s17
    %s27 = scalar_select %p24, %s26, %s17
    %p28 = scmp.ge.s32.totalorder %s27, 2
    %s29 = scalar_select %p28, 0, %s27
    %s30 = ssub.s32 %s17, %s29
    %s31 = ssub.s32 %s18, %s25
    %s32 = sor.u32 %s30, %s31
    %p33 = scmp.eq.s32.totalorder %s32, 0
    %s35 = sadd.s32 %s34, 1
    %s36 = scalar_select %p33, %s34, %s35
    %p39 = pneg %p33
    %p40 = scmp.eq.s32.totalorder %s10, 1
    %p41 = por %p39, %p40
    %p42 = scmp.ne.s32.totalorder %s34, %s37
    %p43 = scmp.eq.s32.totalorder %s10, 0
    %p44 = por %p42, %p43
    %p45 = scmp.ne.s32.totalorder %s34, %s37
    %p46 = scmp.eq.s32.totalorder %s15, 1
    %p47 = por %p45, %p46
    %p48 = scmp.ne.s32.totalorder %s37, %s38
    %p49 = scmp.eq.s32.totalorder %s15, 0
    %p50 = por %p48, %p49
    %p51 = scmp.ne.s32.totalorder %s37, %s38
    %p52 = scmp.eq.s32.totalorder %s16, 1
    %p53 = por %p51, %p52
    %p55 = scmp.ne.s32.totalorder %s38, %s54
    %p56 = scmp.eq.s32.totalorder %s16, 0
    %p57 = por %p55, %p56
    %s58 = ssub.s32 %s17, %s29
    %s59 = ssub.s32 %s18, %s25
    %s60 = sor.u32 %s58, %s59
    %p61 = scmp.eq.s32.totalorder %s60, 0
    %s63 = sadd.s32 %s62, 1
    %s64 = scalar_select %p61, %s62, %s63
    %p67 = pneg %p61
    %p68 = scmp.eq.s32.totalorder %s10, 1
    %p69 = por %p67, %p68
    %p70 = scmp.ne.s32.totalorder %s62, %s65
    %p71 = scmp.eq.s32.totalorder %s10, 0
    %p72 = por %p70, %p71
    %p73 = scmp.ne.s32.totalorder %s62, %s65
    %p74 = scmp.eq.s32.totalorder %s15, 1
    %p75 = por %p73, %p74
    %p76 = scmp.ne.s32.totalorder %s65, %s66
    %p77 = scmp.eq.s32.totalorder %s15, 0
    %p78 = por %p76, %p77
    %p79 = scmp.ne.s32.totalorder %s65, %s66
    %p80 = scmp.eq.s32.totalorder %s16, 1
    %p81 = por %p79, %p80
    %p83 = scmp.ne.s32.totalorder %s66, %s82
    %p84 = scmp.eq.s32.totalorder %s16, 0
    %p85 = por %p83, %p84
    %s87 = sadd.s32 %s86, 1
    %p90 = scmp.eq.s32.totalorder %s10, 1
    %p91 = scmp.ne.s32.totalorder %s86, %s88
    %p92 = scmp.eq.s32.totalorder %s10, 0
    %p93 = por %p91, %p92
    %p94 = scmp.ne.s32.totalorder %s86, %s88
    %p95 = scmp.eq.s32.totalorder %s15, 1
    %p96 = por %p94, %p95
    %p97 = scmp.ne.s32.totalorder %s88, %s89
    %p98 = scmp.eq.s32.totalorder %s15, 0
    %p99 = por %p97, %p98
    %p100 = scmp.ne.s32.totalorder %s88, %s89
    %p101 = scmp.eq.s32.totalorder %s16, 1
    %p102 = por %p100, %p101
    %p104 = scmp.ne.s32.totalorder %s89, %s103
    %p105 = scmp.eq.s32.totalorder %s16, 0
    %p106 = por %p104, %p105
    %s108 = sadd.s32 %s107, 1
    %p111 = scmp.eq.s32.totalorder %s10, 1
    %p112 = scmp.ne.s32.totalorder %s107, %s109
    %p113 = scmp.eq.s32.totalorder %s10, 0
    %p114 = por %p112, %p113
    %p115 = scmp.ne.s32.totalorder %s107, %s109
    %p116 = scmp.eq.s32.totalorder %s15, 1
    %p117 = por %p115, %p116
    %p118 = scmp.ne.s32.totalorder %s109, %s110
    %p119 = scmp.eq.s32.totalorder %s15, 0
    %p120 = por %p118, %p119
    %p121 = scmp.ne.s32.totalorder %s109, %s110
    %p122 = scmp.eq.s32.totalorder %s16, 1
    %p123 = por %p121, %p122
    %p125 = scmp.ne.s32.totalorder %s110, %s124
    %p126 = scmp.eq.s32.totalorder %s16, 0
    %p127 = por %p125, %p126
    %s128 = ssub.s32 %s17, %s29
    %s129 = ssub.s32 %s18, %s25
    %s130 = sor.u32 %s128, %s129
    %p131 = scmp.eq.s32.totalorder %s130, 0
    %s133 = sadd.s32 %s132, 1
    %s134 = scalar_select %p131, %s132, %s133
    %p137 = pneg %p131
    %p138 = scmp.eq.s32.totalorder %s10, 1
    %p139 = por %p137, %p138
    %p140 = scmp.ne.s32.totalorder %s132, %s135
    %p141 = scmp.eq.s32.totalorder %s10, 0
    %p142 = por %p140, %p141
    %p143 = scmp.ne.s32.totalorder %s132, %s135
    %p144 = scmp.eq.s32.totalorder %s15, 1
    %p145 = por %p143, %p144
    %p146 = scmp.ne.s32.totalorder %s135, %s136
    %p147 = scmp.eq.s32.totalorder %s15, 0
    %p148 = por %p146, %p147
    %p149 = scmp.ne.s32.totalorder %s135, %s136
    %p150 = scmp.eq.s32.totalorder %s16, 1
    %p151 = por %p149, %p150
    %p153 = scmp.ne.s32.totalorder %s136, %s152
    %p154 = scmp.eq.s32.totalorder %s16, 0
    %p155 = por %p153, %p154
    %p156 = scmp.le.s32.totalorder 1, %s10
    %p157 = scmp.lt.s32.totalorder %s10, 3
    %p158 = pnand %p156, %p157
    %p159 = pneg %p158
    // Predicated region
    $region9: #{conv_downsample_block.2} parent=5 // pred_check
      _
    $region10: #{conv_downsample_block.2} parent=5 // pred_check_branch
      %161 = sbr.rel (%p158) target = $region12
    $region11: #{conv_downsample_block.2} parent=5 // pred_region
      %s162 = ssub.s32 %s10, 1
      // Predicated region
      $region13: #{conv_downsample_block.2} parent=11 // pred_check
        %p163 = pneg %p99
      $region14: #{conv_downsample_block.2} parent=11 // pred_check_branch
        %165 = sbr.rel (%p163) target = $region16
      $region15: #{conv_downsample_block.2} parent=11 // pred_region
        _
      $region16: #{conv_downsample_block.2} parent=11 // pred_fallthru
        _
      // Predicated region
      $region17: #{conv_downsample_block.2} parent=11 // pred_check
        %p166 = pneg %p120
      $region18: #{conv_downsample_block.2} parent=11 // pred_check_branch
        %168 = sbr.rel (%p166) target = $region20
      $region19: #{conv_downsample_block.2} parent=11 // pred_region
        _
      $region20: #{conv_downsample_block.2} parent=11 // pred_fallthru
        _
    $region12: #{conv_downsample_block.2} parent=5 // pred_fallthru
      _
    %p169 = scmp.lt.s32.totalorder %s10, 2
    // Predicated region
    $region21: #{conv_downsample_block.2} parent=5 // pred_check
      %p170 = pneg %p169
    $region22: #{conv_downsample_block.2} parent=5 // pred_check_branch
      %172 = sbr.rel (%p170) target = $region24
    $region23: #{conv_downsample_block.2} parent=5 // pred_region
      // Predicated region
      $region25: #{conv_downsample_block.2} parent=23 // pred_check
        %p173 = pneg %p44
      $region26: #{conv_downsample_block.2} parent=23 // pred_check_branch
        %175 = sbr.rel (%p173) target = $region28
      $region27: #{conv_downsample_block.2} parent=23 // pred_region
        %s176 = smul.u32 8, %s18
        %p177 = scmp.lt.s32.totalorder %s17, 1
        %s178 = scalar_select %p177, %s17, 1
        %p179 = scmp.lt.s32.totalorder %s176, 7
        %s180 = scalar_select %p179, %s176, 7
        %s181 = smul.addr %s178, 8
        %s182 = sadd.s32 %s180, %s181
        %s183 = smul.addr %s182, 4
        %s184 = scalar_lea.vmem %s0, %s183
        %s185 = smul.u32 8, %s18
      $region28: #{conv_downsample_block.2} parent=23 // pred_fallthru
        _
      // Predicated region
      $region29: #{conv_downsample_block.2} parent=23 // pred_check
        %p186 = pneg %p72
      $region30: #{conv_downsample_block.2} parent=23 // pred_check_branch
        %188 = sbr.rel (%p186) target = $region32
      $region31: #{conv_downsample_block.2} parent=23 // pred_region
        %s189 = smul.u32 8, %s18
        %p190 = scmp.lt.s32.totalorder %s17, 1
        %s191 = scalar_select %p190, %s17, 1
        %p192 = scmp.lt.s32.totalorder %s189, 7
        %s193 = scalar_select %p192, %s189, 7
        %s194 = smul.addr %s191, 8
        %s195 = sadd.s32 %s193, %s194
        %s196 = smul.addr %s195, 4
        %s197 = scalar_lea.vmem %s1, %s196
        %s198 = smul.u32 8, %s18
      $region32: #{conv_downsample_block.2} parent=23 // pred_fallthru
        _
    $region24: #{conv_downsample_block.2} parent=5 // pred_fallthru
      _
    %p199 = scmp.le.s32.totalorder 1, %s10
    %p200 = scmp.lt.s32.totalorder %s10, 3
    %p201 = pnand %p199, %p200
    %p202 = pneg %p201
    // Predicated region
    $region33: #{conv_downsample_block.2} parent=5 // pred_check
      _
    $region34: #{conv_downsample_block.2} parent=5 // pred_check_branch
      %204 = sbr.rel (%p201) target = $region36
    $region35: #{conv_downsample_block.2} parent=5 // pred_region
      %s205 = ssub.s32 %s10, 1
      %s206 = smul.u32 8, %s20
      %p207 = scmp.lt.s32.totalorder %s19, 1
      %s208 = scalar_select %p207, %s19, 1
      %p209 = scmp.lt.s32.totalorder %s206, 7
      %s210 = scalar_select %p209, %s206, 7
      %s211 = smul.addr %s208, 8
      %s212 = sadd.s32 %s210, %s211
      %s213 = smul.addr %s212, 4
      %s214 = scalar_lea.vmem %s0, %s213
      %p215 = pneg %p50
      %p216 = pneg %p47
      %s217 = smul.u32 8, %s20
      %p218 = scmp.lt.s32.totalorder %s19, 1
      %s219 = scalar_select %p218, %s19, 1
      %p220 = scmp.lt.s32.totalorder %s217, 7
      %s221 = scalar_select %p220, %s217, 7
      %s222 = smul.addr %s219, 8
      %s223 = sadd.s32 %s221, %s222
      %s224 = smul.addr %s223, 4
      %s225 = scalar_lea.vmem %s1, %s224
      %p226 = pneg %p78
      %p227 = pneg %p75
      %p228 = pneg %p99
      %p229 = pneg %p96
      %p230 = pneg %p120
      %p231 = pneg %p117
      %p232 = pneg %p148
      %p233 = pneg %p145
      %s234 = smul.u32 8, %s20
      %p235 = scmp.lt.s32.totalorder %s19, 1
      %s236 = scalar_select %p235, %s19, 1
      %p237 = scmp.lt.s32.totalorder %s234, 7
      %s238 = scalar_select %p237, %s234, 7
      %s239 = smul.addr %s236, 16
      %s240 = sadd.s32 %s238, %s239
      %s241 = smul.addr %s240, 4
      %s242 = scalar_lea.vmem %s4, %s241
      %s243 = smul.u32 8, %s20
      %p244 = scmp.lt.s32.totalorder %s19, 1
      %s245 = scalar_select %p244, %s19, 1
      %p246 = scmp.lt.s32.totalorder %s243, 7
      %s247 = scalar_select %p246, %s243, 7
      %s248 = smul.addr %s245, 8
      %s249 = sadd.s32 %s247, %s248
      %s250 = smul.addr %s249, 4
      %s251 = scalar_lea.vmem %s0, %s250
      %s252 = smul.u32 8, %s20
      %s253 = smul.u32 8, %s20
      %p254 = scmp.lt.s32.totalorder %s19, 1
      %s255 = scalar_select %p254, %s19, 1
      %p256 = scmp.lt.s32.totalorder %s253, 7
      %s257 = scalar_select %p256, %s253, 7
      %s258 = smul.addr %s255, 8
      %s259 = sadd.s32 %s257, %s258
      %s260 = smul.addr %s259, 4
      %s261 = scalar_lea.vmem %s1, %s260
      %s262 = smul.u32 8, %s20
      %s263 = smul.u32 8, %s20
      %p264 = scmp.lt.s32.totalorder %s19, 1
      %s265 = scalar_select %p264, %s19, 1
      %p266 = scmp.lt.s32.totalorder %s263, 7
      %s267 = scalar_select %p266, %s263, 7
      %s268 = smul.addr %s265, 16
      %s269 = sadd.s32 %s267, %s268
      %s270 = smul.addr %s269, 4
      %s271 = scalar_lea.vmem %s4, %s270
      %s272 = smul.u32 8, %s20
      %v274 = vld [vmem:[%s2] sm:$0xff]
      %v275 = vld [vmem:[%s2 + $0x8] sm:$0xf]
      %v276 = vld [vmem:[%s251] sm:$0xff]
      %v277 = vld [vmem:[%s251 + $0x8] sm:$0xff]
      %v278 = vld [vmem:[%s251 + $0x10] sm:$0xff]
      %v279 = vld [vmem:[%s251 + $0x18] sm:$0xff]
      %v280 = vld [vmem:[%s3] sm:$0xff]
      %v281 = vld [vmem:[%s3 + $0x8] sm:$0xf]
      %283 = vset.pattern.permute.xlu0 0
      %284 = vperm.xlu0 %283, %v280
      %v285 = vpop.permute.xlu0 %284
      %288 = vset.pattern.permute.xlu0 0
      %289 = vperm.xlu0 %288, %v281
      %v290 = vpop.permute.xlu0 %289
      %v296 = vcombine.high %v276, %v276
      %v297 = vcombine.high %v277, %v277
      %v298 = vcombine.high %v278, %v278
      %v299 = vcombine.high %v279, %v279
      %vm300 = vcmask 31744
      %v302 = vsel %vm300, %v274, 0
      %v305 = vsel %vm300, %v275, 0
      %vm307 = vcmask 1043456
      %v308 = vsel %vm307, %v276, 0
      %v310 = vsel %vm307, %v296, 0
      %v312 = vsel %vm307, %v277, 0
      %v314 = vsel %vm307, %v297, 0
      %v316 = vsel %vm307, %v278, 0
      %v318 = vsel %vm307, %v298, 0
      %v320 = vsel %vm307, %v279, 0
      %v322 = vsel %vm307, %v299, 0
      %324 = vmatprep.subr.mxu0 %v310
      %325 = vmatpush1.msra.mxu0 %v308
      %326 = vmatprep.subr.mxu0 0.0
      %327 = vmatpush1.msra.mxu0 0.0
      %328 = vmatprep.subr.mxu0 0.0
      %329 = vmatpush1.msra.mxu0 0.0
      %330 = vmatprep.subr.mxu0 0.0
      %331 = vmatpush1.msra.mxu0 0.0
      %332 = vmatprep.subr.mxu0 0.0
      %333 = vmatpush1.msra.mxu0 0.0
      %334 = vmatprep.subr.mxu0 0.0
      %335 = vmatpush1.msra.mxu0 0.0
      %336 = vmatprep.subr.mxu0 0.0
      %337 = vmatpush1.msra.mxu0 0.0
      %338 = vmatprep.subr.mxu0 0.0
      %339 = vmatpush1.msra.mxu0 0.0
      %340 = vmatprep.subr.mxu0 0.0
      %341 = vmatpush1.msra.mxu0 0.0
      %342 = vmatprep.subr.mxu0 0.0
      %343 = vmatpush1.msra.mxu0 0.0
      %344 = vmatprep.subr.mxu0 0.0
      %345 = vmatpush1.msra.mxu0 0.0
      %346 = vmatprep.subr.mxu0 0.0
      %347 = vmatpush1.msra.mxu0 0.0
      %348 = vmatprep.subr.mxu0 0.0
      %349 = vmatpush1.msra.mxu0 0.0
      %350 = vmatprep.subr.mxu0 0.0
      %351 = vmatpush1.msra.mxu0 0.0
      %352 = vmatprep.subr.mxu0 0.0
      %353 = vmatpush1.msra.mxu0 0.0
      %354 = vmatprep.subr.mxu0 0.0
      %355 = vmatpush1.msra.mxu0 0.0
      %356 = vmatprep.subr.mxu0 0.0
      %357 = vmatpush1.msra.mxu0 0.0
      %358 = vmatprep.subr.mxu0 0.0
      %359 = vmatpush1.msra.mxu0 0.0
      %360 = vmatprep.subr.mxu0 0.0
      %361 = vmatpush1.msra.mxu0 0.0
      %362 = vmatprep.subr.mxu0 0.0
      %363 = vmatpush1.msra.mxu0 0.0
      %364 = vmatprep.subr.mxu0 0.0
      %365 = vmatpush1.msra.mxu0 0.0
      %366 = vmatprep.subr.mxu0 0.0
      %367 = vmatpush1.msra.mxu0 0.0
      %368 = vmatprep.subr.mxu0 0.0
      %369 = vmatpush1.msra.mxu0 0.0
      %370 = vmatprep.subr.mxu0 0.0
      %371 = vmatpush1.msra.mxu0 0.0
      %372 = vmatprep.subr.mxu0 0.0
      %373 = vmatpush1.msra.mxu0 0.0
      %374 = vmatprep.subr.mxu0 0.0
      %375 = vmatpush1.msra.mxu0 0.0
      %376 = vmatprep.subr.mxu0 0.0
      %377 = vmatpush1.msra.mxu0 0.0
      %378 = vmatprep.subr.mxu0 0.0
      %379 = vmatpush1.msra.mxu0 0.0
      %380 = vmatprep.subr.mxu0 0.0
      %381 = vmatpush1.msra.mxu0 0.0
      %382 = vmatprep.subr.mxu0 0.0
      %383 = vmatpush1.msra.mxu0 0.0
      %384 = vmatprep.subr.mxu0 0.0
      %385 = vmatpush1.msra.mxu0 0.0
      %386 = vmatprep.subr.mxu0 0.0
      %387 = vmatpush1.msra.mxu0 0.0
      %388 = vmatprep.mubr.f32.mxu0 0.0
      %389 = vmatmul.mubr.f32.gmra.mrb[0].mxu0 %v302
      %v390 = vpop.f32.mrb[0].mxu0
      %v391 = vadd.f32 %v285, %v390
      %v392 = vpop.f32.mrb[0].mxu0
      %v393 = vadd.f32 %v285, %v392
      %394 = vmatprep.mubr.f32.mxu0 0.0
      %395 = vmatmul.mubr.f32.gmra.mrb[0].mxu0 %v305
      %v396 = vpop.f32.mrb[0].mxu0
      %v397 = vadd.f32 %v290, %v396
      %v398 = vpop.f32.mrb[0].mxu0
      %v399 = vadd.f32 %v290, %v398
      %400 = vdwg.mxu0
      %401 = vmatprep.subr.mxu0 %v314
      %402 = vmatpush1.msra.mxu0 %v312
      %403 = vmatprep.subr.mxu0 0.0
      %404 = vmatpush1.msra.mxu0 0.0
      %405 = vmatprep.subr.mxu0 0.0
      %406 = vmatpush1.msra.mxu0 0.0
      %407 = vmatprep.subr.mxu0 0.0
      %408 = vmatpush1.msra.mxu0 0.0
      %409 = vmatprep.subr.mxu0 0.0
      %410 = vmatpush1.msra.mxu0 0.0
      %411 = vmatprep.subr.mxu0 0.0
      %412 = vmatpush1.msra.mxu0 0.0
      %413 = vmatprep.subr.mxu0 0.0
      %414 = vmatpush1.msra.mxu0 0.0
      %415 = vmatprep.subr.mxu0 0.0
      %416 = vmatpush1.msra.mxu0 0.0
      %417 = vmatprep.subr.mxu0 0.0
      %418 = vmatpush1.msra.mxu0 0.0
      %419 = vmatprep.subr.mxu0 0.0
      %420 = vmatpush1.msra.mxu0 0.0
      %421 = vmatprep.subr.mxu0 0.0
      %422 = vmatpush1.msra.mxu0 0.0
      %423 = vmatprep.subr.mxu0 0.0
      %424 = vmatpush1.msra.mxu0 0.0
      %425 = vmatprep.subr.mxu0 0.0
      %426 = vmatpush1.msra.mxu0 0.0
      %427 = vmatprep.subr.mxu0 0.0
      %428 = vmatpush1.msra.mxu0 0.0
      %429 = vmatprep.subr.mxu0 0.0
      %430 = vmatpush1.msra.mxu0 0.0
      %431 = vmatprep.subr.mxu0 0.0
      %432 = vmatpush1.msra.mxu0 0.0
      %433 = vmatprep.subr.mxu0 0.0
      %434 = vmatpush1.msra.mxu0 0.0
      %435 = vmatprep.subr.mxu0 0.0
      %436 = vmatpush1.msra.mxu0 0.0
      %437 = vmatprep.subr.mxu0 0.0
      %438 = vmatpush1.msra.mxu0 0.0
      %439 = vmatprep.subr.mxu0 0.0
      %440 = vmatpush1.msra.mxu0 0.0
      %441 = vmatprep.subr.mxu0 0.0
      %442 = vmatpush1.msra.mxu0 0.0
      %443 = vmatprep.subr.mxu0 0.0
      %444 = vmatpush1.msra.mxu0 0.0
      %445 = vmatprep.subr.mxu0 0.0
      %446 = vmatpush1.msra.mxu0 0.0
      %447 = vmatprep.subr.mxu0 0.0
      %448 = vmatpush1.msra.mxu0 0.0
      %449 = vmatprep.subr.mxu0 0.0
      %450 = vmatpush1.msra.mxu0 0.0
      %451 = vmatprep.subr.mxu0 0.0
      %452 = vmatpush1.msra.mxu0 0.0
      %453 = vmatprep.subr.mxu0 0.0
      %454 = vmatpush1.msra.mxu0 0.0
      %455 = vmatprep.subr.mxu0 0.0
      %456 = vmatpush1.msra.mxu0 0.0
      %457 = vmatprep.subr.mxu0 0.0
      %458 = vmatpush1.msra.mxu0 0.0
      %459 = vmatprep.subr.mxu0 0.0
      %460 = vmatpush1.msra.mxu0 0.0
      %461 = vmatprep.subr.mxu0 0.0
      %462 = vmatpush1.msra.mxu0 0.0
      %463 = vmatprep.subr.mxu0 0.0
      %464 = vmatpush1.msra.mxu0 0.0
      %465 = vmatprep.mubr.f32.mxu0 0.0
      %466 = vmatmul.mubr.f32.gmra.mrb[0].mxu0 %v302
      %v467 = vpop.f32.mrb[0].mxu0
      %v468 = vadd.f32 %v285, %v467
      %v469 = vpop.f32.mrb[0].mxu0
      %v470 = vadd.f32 %v285, %v469
      %471 = vmatprep.mubr.f32.mxu0 0.0
      %472 = vmatmul.mubr.f32.gmra.mrb[0].mxu0 %v305
      %v473 = vpop.f32.mrb[0].mxu0
      %v474 = vadd.f32 %v290, %v473
      %v475 = vpop.f32.mrb[0].mxu0
      %v476 = vadd.f32 %v290, %v475
      %477 = vdwg.mxu0
      %478 = vmatprep.subr.mxu0 %v318
      %479 = vmatpush1.msra.mxu0 %v316
      %480 = vmatprep.subr.mxu0 0.0
      %481 = vmatpush1.msra.mxu0 0.0
      %482 = vmatprep.subr.mxu0 0.0
      %483 = vmatpush1.msra.mxu0 0.0
      %484 = vmatprep.subr.mxu0 0.0
      %485 = vmatpush1.msra.mxu0 0.0
      %486 = vmatprep.subr.mxu0 0.0
      %487 = vmatpush1.msra.mxu0 0.0
      %488 = vmatprep.subr.mxu0 0.0
      %489 = vmatpush1.msra.mxu0 0.0
      %490 = vmatprep.subr.mxu0 0.0
      %491 = vmatpush1.msra.mxu0 0.0
      %492 = vmatprep.subr.mxu0 0.0
      %493 = vmatpush1.msra.mxu0 0.0
      %494 = vmatprep.subr.mxu0 0.0
      %495 = vmatpush1.msra.mxu0 0.0
      %496 = vmatprep.subr.mxu0 0.0
      %497 = vmatpush1.msra.mxu0 0.0
      %498 = vmatprep.subr.mxu0 0.0
      %499 = vmatpush1.msra.mxu0 0.0
      %500 = vmatprep.subr.mxu0 0.0
      %501 = vmatpush1.msra.mxu0 0.0
      %502 = vmatprep.subr.mxu0 0.0
      %503 = vmatpush1.msra.mxu0 0.0
      %504 = vmatprep.subr.mxu0 0.0
      %505 = vmatpush1.msra.mxu0 0.0
      %506 = vmatprep.subr.mxu0 0.0
      %507 = vmatpush1.msra.mxu0 0.0
      %508 = vmatprep.subr.mxu0 0.0
      %509 = vmatpush1.msra.mxu0 0.0
      %510 = vmatprep.subr.mxu0 0.0
      %511 = vmatpush1.msra.mxu0 0.0
      %512 = vmatprep.subr.mxu0 0.0
      %513 = vmatpush1.msra.mxu0 0.0
      %514 = vmatprep.subr.mxu0 0.0
      %515 = vmatpush1.msra.mxu0 0.0
      %516 = vmatprep.subr.mxu0 0.0
      %517 = vmatpush1.msra.mxu0 0.0
      %518 = vmatprep.subr.mxu0 0.0
      %519 = vmatpush1.msra.mxu0 0.0
      %520 = vmatprep.subr.mxu0 0.0
      %521 = vmatpush1.msra.mxu0 0.0
      %522 = vmatprep.subr.mxu0 0.0
      %523 = vmatpush1.msra.mxu0 0.0
      %524 = vmatprep.subr.mxu0 0.0
      %525 = vmatpush1.msra.mxu0 0.0
      %526 = vmatprep.subr.mxu0 0.0
      %527 = vmatpush1.msra.mxu0 0.0
      %528 = vmatprep.subr.mxu0 0.0
      %529 = vmatpush1.msra.mxu0 0.0
      %530 = vmatprep.subr.mxu0 0.0
      %531 = vmatpush1.msra.mxu0 0.0
      %532 = vmatprep.subr.mxu0 0.0
      %533 = vmatpush1.msra.mxu0 0.0
      %534 = vmatprep.subr.mxu0 0.0
      %535 = vmatpush1.msra.mxu0 0.0
      %536 = vmatprep.subr.mxu0 0.0
      %537 = vmatpush1.msra.mxu0 0.0
      %538 = vmatprep.subr.mxu0 0.0
      %539 = vmatpush1.msra.mxu0 0.0
      %540 = vmatprep.subr.mxu0 0.0
      %541 = vmatpush1.msra.mxu0 0.0
      %542 = vmatprep.mubr.f32.mxu0 0.0
      %543 = vmatmul.mubr.f32.gmra.mrb[0].mxu0 %v302
      %v544 = vpop.f32.mrb[0].mxu0
      %v545 = vadd.f32 %v285, %v544
      %v546 = vpop.f32.mrb[0].mxu0
      %v547 = vadd.f32 %v285, %v546
      %548 = vmatprep.mubr.f32.mxu0 0.0
      %549 = vmatmul.mubr.f32.gmra.mrb[0].mxu0 %v305
      %v550 = vpop.f32.mrb[0].mxu0
      %v551 = vadd.f32 %v290, %v550
      %v552 = vpop.f32.mrb[0].mxu0
      %v553 = vadd.f32 %v290, %v552
      %554 = vdwg.mxu0
      %555 = vmatprep.subr.mxu0 %v322
      %556 = vmatpush1.msra.mxu0 %v320
      %557 = vmatprep.subr.mxu0 0.0
      %558 = vmatpush1.msra.mxu0 0.0
      %559 = vmatprep.subr.mxu0 0.0
      %560 = vmatpush1.msra.mxu0 0.0
      %561 = vmatprep.subr.mxu0 0.0
      %562 = vmatpush1.msra.mxu0 0.0
      %563 = vmatprep.subr.mxu0 0.0
      %564 = vmatpush1.msra.mxu0 0.0
      %565 = vmatprep.subr.mxu0 0.0
      %566 = vmatpush1.msra.mxu0 0.0
      %567 = vmatprep.subr.mxu0 0.0
      %568 = vmatpush1.msra.mxu0 0.0
      %569 = vmatprep.subr.mxu0 0.0
      %570 = vmatpush1.msra.mxu0 0.0
      %571 = vmatprep.subr.mxu0 0.0
      %572 = vmatpush1.msra.mxu0 0.0
      %573 = vmatprep.subr.mxu0 0.0
      %574 = vmatpush1.msra.mxu0 0.0
      %575 = vmatprep.subr.mxu0 0.0
      %576 = vmatpush1.msra.mxu0 0.0
      %577 = vmatprep.subr.mxu0 0.0
      %578 = vmatpush1.msra.mxu0 0.0
      %579 = vmatprep.subr.mxu0 0.0
      %580 = vmatpush1.msra.mxu0 0.0
      %581 = vmatprep.subr.mxu0 0.0
      %582 = vmatpush1.msra.mxu0 0.0
      %583 = vmatprep.subr.mxu0 0.0
      %584 = vmatpush1.msra.mxu0 0.0
      %585 = vmatprep.subr.mxu0 0.0
      %586 = vmatpush1.msra.mxu0 0.0
      %587 = vmatprep.subr.mxu0 0.0
      %588 = vmatpush1.msra.mxu0 0.0
      %589 = vmatprep.subr.mxu0 0.0
      %590 = vmatpush1.msra.mxu0 0.0
      %591 = vmatprep.subr.mxu0 0.0
      %592 = vmatpush1.msra.mxu0 0.0
      %593 = vmatprep.subr.mxu0 0.0
      %594 = vmatpush1.msra.mxu0 0.0
      %595 = vmatprep.subr.mxu0 0.0
      %596 = vmatpush1.msra.mxu0 0.0
      %597 = vmatprep.subr.mxu0 0.0
      %598 = vmatpush1.msra.mxu0 0.0
      %599 = vmatprep.subr.mxu0 0.0
      %600 = vmatpush1.msra.mxu0 0.0
      %601 = vmatprep.subr.mxu0 0.0
      %602 = vmatpush1.msra.mxu0 0.0
      %603 = vmatprep.subr.mxu0 0.0
      %604 = vmatpush1.msra.mxu0 0.0
      %605 = vmatprep.subr.mxu0 0.0
      %606 = vmatpush1.msra.mxu0 0.0
      %607 = vmatprep.subr.mxu0 0.0
      %608 = vmatpush1.msra.mxu0 0.0
      %609 = vmatprep.subr.mxu0 0.0
      %610 = vmatpush1.msra.mxu0 0.0
      %611 = vmatprep.subr.mxu0 0.0
      %612 = vmatpush1.msra.mxu0 0.0
      %613 = vmatprep.subr.mxu0 0.0
      %614 = vmatpush1.msra.mxu0 0.0
      %615 = vmatprep.subr.mxu0 0.0
      %616 = vmatpush1.msra.mxu0 0.0
      %617 = vmatprep.subr.mxu0 0.0
      %618 = vmatpush1.msra.mxu0 0.0
      %619 = vmatprep.mubr.f32.mxu0 0.0
      %620 = vmatmul.mubr.f32.gmra.mrb[0].mxu0 %v302
      %v621 = vpop.f32.mrb[0].mxu0
      %v622 = vadd.f32 %v285, %v621
      %v623 = vpop.f32.mrb[0].mxu0
      %v624 = vadd.f32 %v285, %v623
      %625 = vmatprep.mubr.f32.mxu0 0.0
      %626 = vmatmul.mubr.f32.gmra.mrb[0].mxu0 %v305
      %v627 = vpop.f32.mrb[0].mxu0
      %v628 = vadd.f32 %v290, %v627
      %v629 = vpop.f32.mrb[0].mxu0
      %v630 = vadd.f32 %v290, %v629
      %631 = vdwg.mxu0
      %v632 = vsub.f32 0.0, %v391
      %v633 = vsub.f32 0.0, %v393
      %v634 = vsub.f32 0.0, %v468
      %v635 = vsub.f32 0.0, %v470
      %v636 = vsub.f32 0.0, %v545
      %v637 = vsub.f32 0.0, %v547
      %v638 = vsub.f32 0.0, %v622
      %v639 = vsub.f32 0.0, %v624
      %v640 = vsub.f32 0.0, %v397
      %v641 = vsub.f32 0.0, %v399
      %v642 = vsub.f32 0.0, %v474
      %v643 = vsub.f32 0.0, %v476
      %v644 = vsub.f32 0.0, %v551
      %v645 = vsub.f32 0.0, %v553
      %v646 = vsub.f32 0.0, %v628
      %v647 = vsub.f32 0.0, %v630
      %v648 = vmul.f32 %v632, 1.442695
      %v649 = vpow.pop %v648
      %v650 = vmul.f32 %v633, 1.442695
      %v651 = vpow.pop %v650
      %v652 = vmul.f32 %v634, 1.442695
      %v653 = vpow.pop %v652
      %v654 = vmul.f32 %v635, 1.442695
      %v655 = vpow.pop %v654
      %v656 = vmul.f32 %v636, 1.442695
      %v657 = vpow.pop %v656
      %v658 = vmul.f32 %v637, 1.442695
      %v659 = vpow.pop %v658
      %v660 = vmul.f32 %v638, 1.442695
      %v661 = vpow.pop %v660
      %v662 = vmul.f32 %v639, 1.442695
      %v663 = vpow.pop %v662
      %v664 = vmul.f32 %v640, 1.442695
      %v665 = vpow.pop %v664
      %v666 = vmul.f32 %v641, 1.442695
      %v667 = vpow.pop %v666
      %v668 = vmul.f32 %v642, 1.442695
      %v669 = vpow.pop %v668
      %v670 = vmul.f32 %v643, 1.442695
      %v671 = vpow.pop %v670
      %v672 = vmul.f32 %v644, 1.442695
      %v673 = vpow.pop %v672
      %v674 = vmul.f32 %v645, 1.442695
      %v675 = vpow.pop %v674
      %v676 = vmul.f32 %v646, 1.442695
      %v677 = vpow.pop %v676
      %v678 = vmul.f32 %v647, 1.442695
      %v679 = vpow.pop %v678
      %v680 = vadd.f32 %v649, 1.0
      %v681 = vadd.f32 %v651, 1.0
      %v682 = vadd.f32 %v653, 1.0
      %v683 = vadd.f32 %v655, 1.0
      %v684 = vadd.f32 %v657, 1.0
      %v685 = vadd.f32 %v659, 1.0
      %v686 = vadd.f32 %v661, 1.0
      %v687 = vadd.f32 %v663, 1.0
      %v688 = vadd.f32 %v665, 1.0
      %v689 = vadd.f32 %v667, 1.0
      %v690 = vadd.f32 %v669, 1.0
      %v691 = vadd.f32 %v671, 1.0
      %v692 = vadd.f32 %v673, 1.0
      %v693 = vadd.f32 %v675, 1.0
      %v694 = vadd.f32 %v677, 1.0
      %v695 = vadd.f32 %v679, 1.0
      %v696 = vrcp.pop %v680
      %v697 = vrcp.pop %v681
      %v698 = vrcp.pop %v682
      %v699 = vrcp.pop %v683
      %v700 = vrcp.pop %v684
      %v701 = vrcp.pop %v685
      %v702 = vrcp.pop %v686
      %v703 = vrcp.pop %v687
      %v704 = vrcp.pop %v688
      %v705 = vrcp.pop %v689
      %v706 = vrcp.pop %v690
      %v707 = vrcp.pop %v691
      %v708 = vrcp.pop %v692
      %v709 = vrcp.pop %v693
      %v710 = vrcp.pop %v694
      %v711 = vrcp.pop %v695
      %v712 = vpack.c.bf16 %v704, %v696
      %v713 = vpack.c.bf16 %v705, %v697
      %v714 = vpack.c.bf16 %v706, %v698
      %v715 = vpack.c.bf16 %v707, %v699
      %v716 = vpack.c.bf16 %v708, %v700
      %v717 = vpack.c.bf16 %v709, %v701
      %v718 = vpack.c.bf16 %v710, %v702
      %v719 = vpack.c.bf16 %v711, %v703
      %v720 = vld [vmem:[%s261] sm:$0x77]
      %v721 = vld [vmem:[%s261 + $0x8] sm:$0x77]
      %v722 = vld [vmem:[%s261 + $0x10] sm:$0x77]
      %v723 = vld [vmem:[%s261 + $0x18] sm:$0x77]
      %v728 = vcombine.high %v720, %v720
      %v729 = vcombine.high %v721, %v721
      %v730 = vcombine.high %v722, %v722
      %v731 = vcombine.high %v723, %v723
      %v736 = vpack.c.bf16 %v720, %v720
      %v737 = vpack.c.bf16 %v728, %v728
      %v738 = vpack.c.bf16 %v721, %v721
      %v739 = vpack.c.bf16 %v729, %v729
      %v740 = vpack.c.bf16 %v722, %v722
      %v741 = vpack.c.bf16 %v730, %v730
      %v742 = vpack.c.bf16 %v723, %v723
      %v743 = vpack.c.bf16 %v731, %v731
      %v752 = vrot.slane %v736, 2
      %v753 = vrot.slane %v737, 2
      %v754 = vrot.slane %v738, 2
      %v755 = vrot.slane %v739, 2
      %v756 = vrot.slane %v740, 2
      %v757 = vrot.slane %v741, 2
      %v758 = vrot.slane %v742, 2
      %v759 = vrot.slane %v743, 2
      %vm760 = vcmask 1045504
      %v763 = vsel %vm760, %v712, %v752
      %v767 = vsel %vm760, %v713, %v753
      %v771 = vsel %vm760, %v714, %v754
      %v775 = vsel %vm760, %v715, %v755
      %v779 = vsel %vm760, %v716, %v756
      %v783 = vsel %vm760, %v717, %v757
      %v787 = vsel %vm760, %v718, %v758
      %v791 = vsel %vm760, %v719, %v759
      %vm793 = vcmask 1047552
      %vm794 = vsmask.f32 7424
      %vm795 = vmand %vm793, %vm794
      %v796 = vsel %vm795, %v763, 0
      %v797 = vsel %vm795, %v767, 0
      %v798 = vsel %vm795, %v771, 0
      %v799 = vsel %vm795, %v775, 0
      %v800 = vsel %vm795, %v779, 0
      %v801 = vsel %vm795, %v783, 0
      %v802 = vsel %vm795, %v787, 0
      %v803 = vsel %vm795, %v791, 0
      %v812 = vunpack.c.l.b16 %v796
      %v813 = vunpack.c.l.b16 %v797
      %v814 = vunpack.c.l.b16 %v798
      %v815 = vunpack.c.l.b16 %v799
      %v816 = vunpack.c.l.b16 %v800
      %v817 = vunpack.c.l.b16 %v801
      %v818 = vunpack.c.l.b16 %v802
      %v819 = vunpack.c.l.b16 %v803
      %v820 = vunpack.c.h.b16 %v796
      %v821 = vunpack.c.h.b16 %v797
      %v822 = vunpack.c.h.b16 %v798
      %v823 = vunpack.c.h.b16 %v799
      %v824 = vunpack.c.h.b16 %v800
      %v825 = vunpack.c.h.b16 %v801
      %v826 = vunpack.c.h.b16 %v802
      %v827 = vunpack.c.h.b16 %v803
      %v828 = vpack.c.b16 %v813, %v812
      %v829 = vpack.c.b16 %v815, %v814
      %v830 = vpack.c.b16 %v817, %v816
      %v831 = vpack.c.b16 %v819, %v818
      %v832 = vpack.c.b16 %v821, %v820
      %v833 = vpack.c.b16 %v823, %v822
      %v834 = vpack.c.b16 %v825, %v824
      %v835 = vpack.c.b16 %v827, %v826
      %844 = vst [vmem:[%s271] sm:$0xff] %v828
      %845 = vst [vmem:[%s271 + $0x8] sm:$0xff] %v829
      %846 = vst [vmem:[%s271 + $0x10] sm:$0xff] %v830
      %847 = vst [vmem:[%s271 + $0x18] sm:$0xff] %v831
      %848 = vst [vmem:[%s271 + $0x20] sm:$0xff] %v832
      %849 = vst [vmem:[%s271 + $0x28] sm:$0xff] %v833
      %850 = vst [vmem:[%s271 + $0x30] sm:$0xff] %v834
      %851 = vst [vmem:[%s271 + $0x38] sm:$0xff] %v835
      %s852 = smul.u32 8, %s20
      %p853 = scmp.lt.s32.totalorder %s19, 1
      %s854 = scalar_select %p853, %s19, 1
      %p855 = scmp.lt.s32.totalorder %s852, 7
      %s856 = scalar_select %p855, %s852, 7
      %s857 = smul.addr %s854, 16
      %s858 = sadd.s32 %s856, %s857
      %s859 = smul.addr %s858, 4
      %s860 = scalar_lea.vmem %s4, %s859
      // Predicated region
      $region37: #{conv_downsample_block.2} parent=35 // pred_check
        %p861 = pneg %p145
      $region38: #{conv_downsample_block.2} parent=35 // pred_check_branch
        %863 = sbr.rel (%p861) target = $region40
      $region39: #{conv_downsample_block.2} parent=35 // pred_region
        %s864 = smul.u32 8, %s20
      $region40: #{conv_downsample_block.2} parent=35 // pred_fallthru
        _
    $region36: #{conv_downsample_block.2} parent=5 // pred_fallthru
      _
    %p865 = scmp.le.s32.totalorder 2, %s10
    // Predicated region
    $region41: #{conv_downsample_block.2} parent=5 // pred_check
      %p866 = pneg %p865
    $region42: #{conv_downsample_block.2} parent=5 // pred_check_branch
      %868 = sbr.rel (%p866) target = $region44
    $region43: #{conv_downsample_block.2} parent=5 // pred_region
      %s869 = ssub.s32 %s10, 2
      // Predicated region
      $region45: #{conv_downsample_block.2} parent=43 // pred_check
        %p870 = pneg %p151
      $region46: #{conv_downsample_block.2} parent=43 // pred_check_branch
        %872 = sbr.rel (%p870) target = $region48
      $region47: #{conv_downsample_block.2} parent=43 // pred_region
        %s873 = smul.u32 8, %s22
        %p874 = scmp.lt.s32.totalorder %s21, 1
        %s875 = scalar_select %p874, %s21, 1
        %p876 = scmp.lt.s32.totalorder %s873, 7
        %s877 = scalar_select %p876, %s873, 7
        %s878 = smul.addr %s875, 16
        %s879 = sadd.s32 %s877, %s878
        %s880 = smul.addr %s879, 4
        %s881 = scalar_lea.vmem %s4, %s880
      $region48: #{conv_downsample_block.2} parent=43 // pred_fallthru
        _
    $region44: #{conv_downsample_block.2} parent=5 // pred_fallthru
      _
  $region6: #{conv_downsample_block.2} parent=0 // loop_footer
    %s14 = sadd.s32 1, %s10
  $region7: #{conv_downsample_block.2} parent=0 // loop_footer_branch
    %9 = sbr.rel target = $region3
  $region8: #{conv_downsample_block.2} parent=0 // loop_exit
    _

// kernel: conv_downsample_block.3
$region0: #{conv_downsample_block.3}
  #allocation0 [shape = 'u32[]', space=smem, size = 0x4, offset = 0x4, fixed_abs, tag = 'smem constant byte address 0x4 - core index']
  #allocation1 [shape = 'u32[144,128]{1,0:T(1,128)}', space=vmem, size = 0x12000, scoped, tag = 'internal scratch']
  %s0 = inlined_call_operand.vmem [shape: bf16[2,2,128,144], index: 0, kind: input, shape index: {}]
  %s1 = inlined_call_operand.vmem [shape: bf16[2,8,128], index: 1, kind: input, shape index: {}]
  %s2 = inlined_call_operand.vmem [shape: f32[8,1], index: 2, kind: input, shape index: {}]
  %s3 = inlined_call_operand.vmem [shape: f32[2,8,256], index: 3, kind: output, shape index: {}]
  %s4 = sld [smem:[#allocation0]]
  $region45: #{conv_downsample_block.3} parent=0
    _
  %s6 = ssub.s32 1, %s4
  %s7 = scalar_select 0, %s6, %s4
  loop: start=0, step=1, limit=6
  $region2: #{conv_downsample_block.3} parent=0 // loop_pre_header
    _
  $region3: #{conv_downsample_block.3} parent=0 // loop_header
    %s9 = sphi 0, %s13
    %p10 = scmp.ge.s32.totalorder %s9, 6
    %s16 = sphi 0, %s28
    %s17 = sphi 0, %s24
    %s18 = sphi 0, %s16
    %s19 = sphi 0, %s17
    %s20 = sphi 0, %s18
    %s21 = sphi 0, %s19
    %s33 = sphi 0, %s35
    %s36 = sphi 0, %s33
    %s37 = sphi 0, %s36
    %s53 = sphi 0, %s37
    %s57 = sphi 0, %s57
    %s59 = sphi 0, %s57
    %s60 = sphi 0, %s59
    %s74 = sphi 0, %s60
    %s78 = sphi 0, %s78
    %s80 = sphi 0, %s78
    %s81 = sphi 0, %s80
    %s95 = sphi 0, %s81
    %s103 = sphi 0, %s105
    %s106 = sphi 0, %s103
    %s107 = sphi 0, %s106
    %s123 = sphi 0, %s107
  $region4: #{conv_downsample_block.3} parent=0 // loop_header_branch
    %12 = sbr.rel (%p10) target = $region8
  $region5: #{conv_downsample_block.3} parent=0 // loop_body
    %s14 = ssub.s32 %s9, 1
    %s15 = ssub.s32 %s9, 2
    %s22 = sadd.s32 1, %s17
    %p23 = scmp.ge.s32.totalorder %s22, 2
    %s24 = scalar_select %p23, 0, %s22
    %s25 = sadd.s32 1, %s16
    %s26 = scalar_select %p23, %s25, %s16
    %p27 = scmp.ge.s32.totalorder %s26, 2
    %s28 = scalar_select %p27, 0, %s26
    %s29 = ssub.s32 %s16, %s28
    %s30 = ssub.s32 %s17, %s24
    %s31 = sor.u32 %s29, %s30
    %p32 = scmp.eq.s32.totalorder %s31, 0
    %s34 = sadd.s32 %s33, 1
    %s35 = scalar_select %p32, %s33, %s34
    %p38 = pneg %p32
    %p39 = scmp.eq.s32.totalorder %s9, 3
    %p40 = por %p38, %p39
    %p41 = scmp.ne.s32.totalorder %s33, %s36
    %p42 = scmp.eq.s32.totalorder %s9, 0
    %p43 = por %p41, %p42
    %p44 = scmp.ne.s32.totalorder %s33, %s36
    %p45 = scmp.eq.s32.totalorder %s14, 3
    %p46 = por %p44, %p45
    %p47 = scmp.ne.s32.totalorder %s36, %s37
    %p48 = scmp.eq.s32.totalorder %s14, 0
    %p49 = por %p47, %p48
    %p50 = scmp.ne.s32.totalorder %s36, %s37
    %p51 = scmp.eq.s32.totalorder %s15, 3
    %p52 = por %p50, %p51
    %p54 = scmp.ne.s32.totalorder %s37, %s53
    %p55 = scmp.eq.s32.totalorder %s15, 0
    %p56 = por %p54, %p55
    %s58 = sadd.s32 %s57, 1
    %p61 = scmp.eq.s32.totalorder %s9, 3
    %p62 = scmp.ne.s32.totalorder %s57, %s59
    %p63 = scmp.eq.s32.totalorder %s9, 0
    %p64 = por %p62, %p63
    %p65 = scmp.ne.s32.totalorder %s57, %s59
    %p66 = scmp.eq.s32.totalorder %s14, 3
    %p67 = por %p65, %p66
    %p68 = scmp.ne.s32.totalorder %s59, %s60
    %p69 = scmp.eq.s32.totalorder %s14, 0
    %p70 = por %p68, %p69
    %p71 = scmp.ne.s32.totalorder %s59, %s60
    %p72 = scmp.eq.s32.totalorder %s15, 3
    %p73 = por %p71, %p72
    %p75 = scmp.ne.s32.totalorder %s60, %s74
    %p76 = scmp.eq.s32.totalorder %s15, 0
    %p77 = por %p75, %p76
    %s79 = sadd.s32 %s78, 1
    %p82 = scmp.eq.s32.totalorder %s9, 3
    %p83 = scmp.ne.s32.totalorder %s78, %s80
    %p84 = scmp.eq.s32.totalorder %s9, 0
    %p85 = por %p83, %p84
    %p86 = scmp.ne.s32.totalorder %s78, %s80
    %p87 = scmp.eq.s32.totalorder %s14, 3
    %p88 = por %p86, %p87
    %p89 = scmp.ne.s32.totalorder %s80, %s81
    %p90 = scmp.eq.s32.totalorder %s14, 0
    %p91 = por %p89, %p90
    %p92 = scmp.ne.s32.totalorder %s80, %s81
    %p93 = scmp.eq.s32.totalorder %s15, 3
    %p94 = por %p92, %p93
    %p96 = scmp.ne.s32.totalorder %s81, %s95
    %p97 = scmp.eq.s32.totalorder %s15, 0
    %p98 = por %p96, %p97
    %s99 = ssub.s32 %s16, %s28
    %s100 = ssub.s32 %s17, %s24
    %s101 = sor.u32 %s99, %s100
    %p102 = scmp.eq.s32.totalorder %s101, 0
    %s104 = sadd.s32 %s103, 1
    %s105 = scalar_select %p102, %s103, %s104
    %p108 = pneg %p102
    %p109 = scmp.eq.s32.totalorder %s9, 3
    %p110 = por %p108, %p109
    %p111 = scmp.ne.s32.totalorder %s103, %s106
    %p112 = scmp.eq.s32.totalorder %s9, 0
    %p113 = por %p111, %p112
    %p114 = scmp.ne.s32.totalorder %s103, %s106
    %p115 = scmp.eq.s32.totalorder %s14, 3
    %p116 = por %p114, %p115
    %p117 = scmp.ne.s32.totalorder %s106, %s107
    %p118 = scmp.eq.s32.totalorder %s14, 0
    %p119 = por %p117, %p118
    %p120 = scmp.ne.s32.totalorder %s106, %s107
    %p121 = scmp.eq.s32.totalorder %s15, 3
    %p122 = por %p120, %p121
    %p124 = scmp.ne.s32.totalorder %s107, %s123
    %p125 = scmp.eq.s32.totalorder %s15, 0
    %p126 = por %p124, %p125
    %p127 = scmp.le.s32.totalorder 1, %s9
    %p128 = scmp.lt.s32.totalorder %s9, 5
    %p129 = pnand %p127, %p128
    %p130 = pneg %p129
    // Predicated region
    $region9: #{conv_downsample_block.3} parent=5 // pred_check
      _
    $region10: #{conv_downsample_block.3} parent=5 // pred_check_branch
      %132 = sbr.rel (%p129) target = $region12
    $region11: #{conv_downsample_block.3} parent=5 // pred_region
      %s133 = ssub.s32 %s9, 1
      // Predicated region
      $region13: #{conv_downsample_block.3} parent=11 // pred_check
        %p134 = pneg %p70
      $region14: #{conv_downsample_block.3} parent=11 // pred_check_branch
        %136 = sbr.rel (%p134) target = $region16
      $region15: #{conv_downsample_block.3} parent=11 // pred_region
        _
      $region16: #{conv_downsample_block.3} parent=11 // pred_fallthru
        _
      // Predicated region
      $region17: #{conv_downsample_block.3} parent=11 // pred_check
        %p137 = pneg %p91
      $region18: #{conv_downsample_block.3} parent=11 // pred_check_branch
        %139 = sbr.rel (%p137) target = $region20
      $region19: #{conv_downsample_block.3} parent=11 // pred_region
        _
      $region20: #{conv_downsample_block.3} parent=11 // pred_fallthru
        _
    $region12: #{conv_downsample_block.3} parent=5 // pred_fallthru
      _
    %p140 = scmp.lt.s32.totalorder %s9, 4
    // Predicated region
    $region21: #{conv_downsample_block.3} parent=5 // pred_check
      %p141 = pneg %p140
    $region22: #{conv_downsample_block.3} parent=5 // pred_check_branch
      %143 = sbr.rel (%p141) target = $region24
    $region23: #{conv_downsample_block.3} parent=5 // pred_region
      // Predicated region
      $region25: #{conv_downsample_block.3} parent=23 // pred_check
        %p144 = pneg %p43
      $region26: #{conv_downsample_block.3} parent=23 // pred_check_branch
        %146 = sbr.rel (%p144) target = $region28
      $region27: #{conv_downsample_block.3} parent=23 // pred_region
        %p147 = scmp.lt.s32.totalorder %s16, 1
        %s148 = scalar_select %p147, %s16, 1
        %p149 = scmp.lt.s32.totalorder %s17, 1
        %s150 = scalar_select %p149, %s17, 1
        %s151 = smul.addr %s150, 32
        %s152 = smul.addr %s148, 64
        %s153 = sadd.s32 %s151, %s152
        %s154 = smul.addr %s153, 4
        %s155 = scalar_lea.vmem %s0, %s154
      $region28: #{conv_downsample_block.3} parent=23 // pred_fallthru
        _
    $region24: #{conv_downsample_block.3} parent=5 // pred_fallthru
      _
    %p156 = scmp.le.s32.totalorder 1, %s9
    %p157 = scmp.lt.s32.totalorder %s9, 5
    %p158 = pnand %p156, %p157
    %p159 = pneg %p158
    // Predicated region
    $region29: #{conv_downsample_block.3} parent=5 // pred_check
      _
    $region30: #{conv_downsample_block.3} parent=5 // pred_check_branch
      %161 = sbr.rel (%p158) target = $region32
    $region31: #{conv_downsample_block.3} parent=5 // pred_region
      %s162 = ssub.s32 %s9, 1
      %p163 = scmp.lt.s32.totalorder %s18, 1
      %s164 = scalar_select %p163, %s18, 1
      %p165 = scmp.lt.s32.totalorder %s19, 1
      %s166 = scalar_select %p165, %s19, 1
      %s167 = smul.addr %s166, 32
      %s168 = smul.addr %s164, 64
      %s169 = sadd.s32 %s167, %s168
      %s170 = smul.addr %s169, 4
      %s171 = scalar_lea.vmem %s0, %s170
      %p172 = pneg %p49
      %p173 = pneg %p46
      %p174 = pneg %p70
      %p175 = pneg %p67
      %p176 = pneg %p91
      %p177 = pneg %p88
      %p178 = pneg %p119
      %p179 = pneg %p116
      %p180 = scmp.lt.s32.totalorder %s18, 1
      %s181 = scalar_select %p180, %s18, 1
      %p182 = scmp.lt.s32.totalorder %s19, 1
      %s183 = scalar_select %p182, %s19, 1
      %s184 = smul.addr %s181, 2
      %s185 = sadd.s32 %s183, %s184
      %s186 = smul.addr %s185, 8
      %s187 = scalar_lea.vmem %s3, %s186
      %p188 = scmp.lt.s32.totalorder %s18, 1
      %s189 = scalar_select %p188, %s18, 1
      %p190 = scmp.lt.s32.totalorder %s19, 1
      %s191 = scalar_select %p190, %s19, 1
      %s192 = smul.addr %s191, 32
      %s193 = smul.addr %s189, 64
      %s194 = sadd.s32 %s192, %s193
      %s195 = smul.addr %s194, 4
      %s196 = scalar_lea.vmem %s0, %s195
      %p197 = scmp.lt.s32.totalorder %s18, 1
      %s198 = scalar_select %p197, %s18, 1
      %p199 = scmp.lt.s32.totalorder %s19, 1
      %s200 = scalar_select %p199, %s19, 1
      %s201 = smul.addr %s198, 2
      %s202 = sadd.s32 %s200, %s201
      %s203 = smul.addr %s202, 8
      %s204 = scalar_lea.vmem %s3, %s203
      %v206 = vld [vmem:[%s196] sm:$0xf]
      %v207 = vld [vmem:[%s196 + $0x8] sm:$0xf]
      %v208 = vld [vmem:[%s196 + $0x10] sm:$0xf]
      %v209 = vld [vmem:[%s196 + $0x18] sm:$0xf]
      %v210 = vld [vmem:[%s196 + $0x20] sm:$0xf]
      %v211 = vld [vmem:[%s196 + $0x28] sm:$0xf]
      %v212 = vld [vmem:[%s196 + $0x30] sm:$0xf]
      %v213 = vld [vmem:[%s196 + $0x38] sm:$0xf]
      %v214 = vld [vmem:[%s196 + $0x40] sm:$0xf]
      %v215 = vld [vmem:[%s196 + $0x48] sm:$0xf]
      %v216 = vld [vmem:[%s196 + $0x50] sm:$0xf]
      %v217 = vld [vmem:[%s196 + $0x58] sm:$0xf]
      %v218 = vld [vmem:[%s196 + $0x60] sm:$0xf]
      %v219 = vld [vmem:[%s196 + $0x68] sm:$0xf]
      %v220 = vld [vmem:[%s196 + $0x70] sm:$0xf]
      %v221 = vld [vmem:[%s196 + $0x78] sm:$0xf]
      %v222 = vld [vmem:[%s196] sm:$0xff]
      %v223 = vld [vmem:[%s196 + $0x8] sm:$0xff]
      %v224 = vld [vmem:[%s196 + $0x10] sm:$0xff]
      %v225 = vld [vmem:[%s196 + $0x18] sm:$0xff]
      %v226 = vld [vmem:[%s196 + $0x20] sm:$0xff]
      %v227 = vld [vmem:[%s196 + $0x28] sm:$0xff]
      %v228 = vld [vmem:[%s196 + $0x30] sm:$0xff]
      %v229 = vld [vmem:[%s196 + $0x38] sm:$0xff]
      %v230 = vld [vmem:[%s196 + $0x40] sm:$0xff]
      %v231 = vld [vmem:[%s196 + $0x48] sm:$0xff]
      %v232 = vld [vmem:[%s196 + $0x50] sm:$0xff]
      %v233 = vld [vmem:[%s196 + $0x58] sm:$0xff]
      %v234 = vld [vmem:[%s196 + $0x60] sm:$0xff]
      %v235 = vld [vmem:[%s196 + $0x68] sm:$0xff]
      %v236 = vld [vmem:[%s196 + $0x70] sm:$0xff]
      %v237 = vld [vmem:[%s196 + $0x78] sm:$0xff]
      %v238 = vld [vmem:[%s1] sm:$0xf]
      %s239 = scalar_lea.vmem %s1, 4
      %v240 = vld [vmem:[%s239] sm:$0xf]
      %v257 = vunpack.c.l.b16 %v222
      %v258 = vunpack.c.h.b16 %v222
      %v259 = vunpack.c.l.b16 %v223
      %v260 = vunpack.c.h.b16 %v223
      %v261 = vunpack.c.l.b16 %v224
      %v262 = vunpack.c.h.b16 %v224
      %v263 = vunpack.c.l.b16 %v225
      %v264 = vunpack.c.h.b16 %v225
      %v265 = vunpack.c.l.b16 %v226
      %v266 = vunpack.c.h.b16 %v226
      %v267 = vunpack.c.l.b16 %v227
      %v268 = vunpack.c.h.b16 %v227
      %v269 = vunpack.c.l.b16 %v228
      %v270 = vunpack.c.h.b16 %v228
      %v271 = vunpack.c.l.b16 %v229
      %v272 = vunpack.c.h.b16 %v229
      %v273 = vunpack.c.l.b16 %v230
      %v274 = vunpack.c.h.b16 %v230
      %v275 = vunpack.c.l.b16 %v231
      %v276 = vunpack.c.h.b16 %v231
      %v277 = vunpack.c.l.b16 %v232
      %v278 = vunpack.c.h.b16 %v232
      %v279 = vunpack.c.l.b16 %v233
      %v280 = vunpack.c.h.b16 %v233
      %v281 = vunpack.c.l.b16 %v234
      %v282 = vunpack.c.h.b16 %v234
      %v283 = vunpack.c.l.b16 %v235
      %v284 = vunpack.c.h.b16 %v235
      %v285 = vunpack.c.l.b16 %v236
      %v286 = vunpack.c.h.b16 %v236
      %v287 = vunpack.c.l.b16 %v237
      %v288 = vunpack.c.h.b16 %v237
      %v289 = vpack.c.b16 %v259, %v257
      %v290 = vpack.c.b16 %v260, %v258
      %v291 = vpack.c.b16 %v263, %v261
      %v292 = vpack.c.b16 %v264, %v262
      %v293 = vpack.c.b16 %v267, %v265
      %v294 = vpack.c.b16 %v268, %v266
      %v295 = vpack.c.b16 %v271, %v269
      %v296 = vpack.c.b16 %v272, %v270
      %v297 = vpack.c.b16 %v275, %v273
      %v298 = vpack.c.b16 %v276, %v274
      %v299 = vpack.c.b16 %v279, %v277
      %v300 = vpack.c.b16 %v280, %v278
      %v301 = vpack.c.b16 %v283, %v281
      %v302 = vpack.c.b16 %v284, %v282
      %v303 = vpack.c.b16 %v287, %v285
      %v304 = vpack.c.b16 %v288, %v286
      %305 = vrot.lane.b32.xlu0 %v289, 112
      %v306 = vpop.permute.xlu0 %305
      %307 = vrot.lane.b32.xlu0 %v290, 112
      %v308 = vpop.permute.xlu0 %307
      %309 = vrot.lane.b32.xlu0 %v291, 112
      %v310 = vpop.permute.xlu0 %309
      %311 = vrot.lane.b32.xlu0 %v292, 112
      %v312 = vpop.permute.xlu0 %311
      %313 = vrot.lane.b32.xlu0 %v293, 112
      %v314 = vpop.permute.xlu0 %313
      %315 = vrot.lane.b32.xlu0 %v294, 112
      %v316 = vpop.permute.xlu0 %315
      %317 = vrot.lane.b32.xlu0 %v295, 112
      %v318 = vpop.permute.xlu0 %317
      %319 = vrot.lane.b32.xlu0 %v296, 112
      %v320 = vpop.permute.xlu0 %319
      %321 = vrot.lane.b32.xlu0 %v297, 112
      %v322 = vpop.permute.xlu0 %321
      %323 = vrot.lane.b32.xlu0 %v298, 112
      %v324 = vpop.permute.xlu0 %323
      %325 = vrot.lane.b32.xlu0 %v299, 112
      %v326 = vpop.permute.xlu0 %325
      %327 = vrot.lane.b32.xlu0 %v300, 112
      %v328 = vpop.permute.xlu0 %327
      %329 = vrot.lane.b32.xlu0 %v301, 112
      %v330 = vpop.permute.xlu0 %329
      %331 = vrot.lane.b32.xlu0 %v302, 112
      %v332 = vpop.permute.xlu0 %331
      %333 = vrot.lane.b32.xlu0 %v303, 112
      %v334 = vpop.permute.xlu0 %333
      %335 = vrot.lane.b32.xlu0 %v304, 112
      %v336 = vpop.permute.xlu0 %335
      %vm337 = vcmask 916480
      %v338 = vsel %vm337, %v306, %v308
      %v339 = vsel %vm337, %v310, %v312
      %v340 = vsel %vm337, %v314, %v316
      %v341 = vsel %vm337, %v318, %v320
      %v342 = vsel %vm337, %v322, %v324
      %v343 = vsel %vm337, %v326, %v328
      %v344 = vsel %vm337, %v330, %v332
      %v345 = vsel %vm337, %v334, %v336
      %354 = vmatprep.subr.bf16.mxu0 0
      %355 = vmatpush1.bf16.msra.mxu0 %v338
      %356 = vmatprep.subr.bf16.mxu0 0
      %357 = vmatpush1.bf16.msra.mxu0 %v339
      %358 = vmatprep.subr.bf16.mxu0 0
      %359 = vmatpush1.bf16.msra.mxu0 %v340
      %360 = vmatprep.subr.bf16.mxu0 0
      %361 = vmatpush1.bf16.msra.mxu0 %v341
      %362 = vmatprep.subr.bf16.mxu0 0
      %363 = vmatpush1.bf16.msra.mxu0 %v342
      %364 = vmatprep.subr.bf16.mxu0 0
      %365 = vmatpush1.bf16.msra.mxu0 %v343
      %366 = vmatprep.subr.bf16.mxu0 0
      %367 = vmatpush1.bf16.msra.mxu0 %v344
      %368 = vmatprep.subr.bf16.mxu0 0
      %369 = vmatpush1.bf16.msra.mxu0 %v345
      %370 = vmatprep.subr.bf16.mxu0 0
      %371 = vmatpush1.bf16.msra.mxu0 0
      %372 = vmatprep.subr.bf16.mxu0 0
      %373 = vmatpush1.bf16.msra.mxu0 0
      %374 = vmatprep.subr.bf16.mxu0 0
      %375 = vmatpush1.bf16.msra.mxu0 0
      %376 = vmatprep.subr.bf16.mxu0 0
      %377 = vmatpush1.bf16.msra.mxu0 0
      %378 = vmatprep.subr.bf16.mxu0 0
      %379 = vmatpush1.bf16.msra.mxu0 0
      %380 = vmatprep.subr.bf16.mxu0 0
      %381 = vmatpush1.bf16.msra.mxu0 0
      %382 = vmatprep.subr.bf16.mxu0 0
      %383 = vmatpush1.bf16.msra.mxu0 0
      %384 = vmatprep.subr.bf16.mxu0 0
      %385 = vmatpush1.bf16.msra.mxu0 0
      %386 = vmatprep.mubr.bf16.mxu0 0
      %387 = vmatmul.mubr.bf16.gmra.mrb[0].mxu0 %v240
      %v388 = vpop.f32.mrb[0].mxu0
      %v389 = vadd.f32 0.0, %v388
      %v390 = vpop.f32.mrb[0].mxu0
      %v391 = vpop.f32.mrb[0].mxu0
      %v392 = vpop.f32.mrb[0].mxu0
      %393 = vdwg.mxu0
      %v410 = vunpack.c.l.b16 %v206
      %v411 = vunpack.c.l.b16 %v207
      %v412 = vunpack.c.l.b16 %v208
      %v413 = vunpack.c.l.b16 %v209
      %v414 = vunpack.c.l.b16 %v210
      %v415 = vunpack.c.l.b16 %v211
      %v416 = vunpack.c.l.b16 %v212
      %v417 = vunpack.c.l.b16 %v213
      %v418 = vunpack.c.l.b16 %v214
      %v419 = vunpack.c.l.b16 %v215
      %v420 = vunpack.c.l.b16 %v216
      %v421 = vunpack.c.l.b16 %v217
      %v422 = vunpack.c.l.b16 %v218
      %v423 = vunpack.c.l.b16 %v219
      %v424 = vunpack.c.l.b16 %v220
      %v425 = vunpack.c.l.b16 %v221
      %v426 = vpack.c.b16 %v411, %v410
      %v427 = vpack.c.b16 %v413, %v412
      %v428 = vpack.c.b16 %v415, %v414
      %v429 = vpack.c.b16 %v417, %v416
      %v430 = vpack.c.b16 %v419, %v418
      %v431 = vpack.c.b16 %v421, %v420
      %v432 = vpack.c.b16 %v423, %v422
      %v433 = vpack.c.b16 %v425, %v424
      %442 = vmatprep.subr.bf16.mxu0 0
      %443 = vmatpush1.bf16.msra.mxu0 %v426
      %444 = vmatprep.subr.bf16.mxu0 0
      %445 = vmatpush1.bf16.msra.mxu0 %v427
      %446 = vmatprep.subr.bf16.mxu0 0
      %447 = vmatpush1.bf16.msra.mxu0 %v428
      %448 = vmatprep.subr.bf16.mxu0 0
      %449 = vmatpush1.bf16.msra.mxu0 %v429
      %450 = vmatprep.subr.bf16.mxu0 0
      %451 = vmatpush1.bf16.msra.mxu0 %v430
      %452 = vmatprep.subr.bf16.mxu0 0
      %453 = vmatpush1.bf16.msra.mxu0 %v431
      %454 = vmatprep.subr.bf16.mxu0 0
      %455 = vmatpush1.bf16.msra.mxu0 %v432
      %456 = vmatprep.subr.bf16.mxu0 0
      %457 = vmatpush1.bf16.msra.mxu0 %v433
      %458 = vmatprep.subr.bf16.mxu0 0
      %459 = vmatpush1.bf16.msra.mxu0 0
      %460 = vmatprep.subr.bf16.mxu0 0
      %461 = vmatpush1.bf16.msra.mxu0 0
      %462 = vmatprep.subr.bf16.mxu0 0
      %463 = vmatpush1.bf16.msra.mxu0 0
      %464 = vmatprep.subr.bf16.mxu0 0
      %465 = vmatpush1.bf16.msra.mxu0 0
      %466 = vmatprep.subr.bf16.mxu0 0
      %467 = vmatpush1.bf16.msra.mxu0 0
      %468 = vmatprep.subr.bf16.mxu0 0
      %469 = vmatpush1.bf16.msra.mxu0 0
      %470 = vmatprep.subr.bf16.mxu0 0
      %471 = vmatpush1.bf16.msra.mxu0 0
      %472 = vmatprep.subr.bf16.mxu0 0
      %473 = vmatpush1.bf16.msra.mxu0 0
      %474 = vmatprep.mubr.bf16.mxu0 0
      %475 = vmatmul.mubr.bf16.gmra.mrb[0].mxu0 %v238
      %v476 = vpop.f32.mrb[0].mxu0
      %v477 = vadd.f32 %v389, %v476
      %v478 = vpop.f32.mrb[0].mxu0
      %v479 = vpop.f32.mrb[0].mxu0
      %v480 = vpop.f32.mrb[0].mxu0
      %481 = vdwg.mxu0
      %v482 = vld [vmem:[%s2] sm:$0xff]
      %484 = vset.pattern.permute.xlu0 0
      %485 = vperm.xlu0 %484, %v482
      %v486 = vpop.permute.xlu0 %485
      %v488 = vadd.f32 %v477, %v486
      %v489 = vtanh.pop %v488
      %490 = vst [vmem:[%s204] sm:$0xff] %v489
      %p491 = scmp.lt.s32.totalorder %s18, 1
      %s492 = scalar_select %p491, %s18, 1
      %p493 = scmp.lt.s32.totalorder %s19, 1
      %s494 = scalar_select %p493, %s19, 1
      %s495 = smul.addr %s492, 2
      %s496 = sadd.s32 %s494, %s495
      %s497 = smul.addr %s496, 8
      %s498 = scalar_lea.vmem %s3, %s497
      // Predicated region
      $region33: #{conv_downsample_block.3} parent=31 // pred_check
        %p499 = pneg %p116
      $region34: #{conv_downsample_block.3} parent=31 // pred_check_branch
        %501 = sbr.rel (%p499) target = $region36
      $region35: #{conv_downsample_block.3} parent=31 // pred_region
        _
      $region36: #{conv_downsample_block.3} parent=31 // pred_fallthru
        _
    $region32: #{conv_downsample_block.3} parent=5 // pred_fallthru
      _
    %p502 = scmp.le.s32.totalorder 2, %s9
    // Predicated region
    $region37: #{conv_downsample_block.3} parent=5 // pred_check
      %p503 = pneg %p502
    $region38: #{conv_downsample_block.3} parent=5 // pred_check_branch
      %505 = sbr.rel (%p503) target = $region40
    $region39: #{conv_downsample_block.3} parent=5 // pred_region
      %s506 = ssub.s32 %s9, 2
      // Predicated region
      $region41: #{conv_downsample_block.3} parent=39 // pred_check
        %p507 = pneg %p122
      $region42: #{conv_downsample_block.3} parent=39 // pred_check_branch
        %509 = sbr.rel (%p507) target = $region44
      $region43: #{conv_downsample_block.3} parent=39 // pred_region
        %p510 = scmp.lt.s32.totalorder %s20, 1
        %s511 = scalar_select %p510, %s20, 1
        %p512 = scmp.lt.s32.totalorder %s21, 1
        %s513 = scalar_select %p512, %s21, 1
        %s514 = smul.addr %s511, 2
        %s515 = sadd.s32 %s513, %s514
        %s516 = smul.addr %s515, 8
        %s517 = scalar_lea.vmem %s3, %s516
      $region44: #{conv_downsample_block.3} parent=39 // pred_fallthru
        _
    $region40: #{conv_downsample_block.3} parent=5 // pred_fallthru
      _
  $region6: #{conv_downsample_block.3} parent=0 // loop_footer
    %s13 = sadd.s32 1, %s9
  $region7: #{conv_downsample_block.3} parent=0 // loop_footer_branch
    %8 = sbr.rel target = $region3
  $region8: #{conv_downsample_block.3} parent=0 // loop_exit
    _

</llo_original>
